<compile_context>
chip_gen: v5e
topology: v5e:2x2
jax: 0.10.0
libtpu: 0.0.40
codegen_flags: <defaults>
</compile_context>

<pallas_src>
import numpy as np

import jax
import jax.numpy as jnp
from jax.experimental import pallas as pl
from jax.experimental.pallas import tpu as pltpu

KK = 4            # conv kernel size (4x4)
STRIDE = 2        # conv stride
NEG_SLOPE = 0.01  # nn.LeakyReLU() default


def _round_up(n, m):
    return (n + m - 1) // m * m


# ---------------------------------------------------------------------------
# Fused kernel builder.  All shapes / offsets are static Python ints (cfg).
# ---------------------------------------------------------------------------
def _make_kernel(cfg, mt):
    layers = cfg["layers"]
    fc = cfg["fc"]
    hidden = fc["hidden"]

    def kernel(x_ref, w_ref, b_ref, o_ref, *p_refs):
        # x_ref : (mt, H0*C0*W0) f32  -- image rows, (c-major, w-minor) per row
        # w_ref : (rows, 96)     f32  -- packed W1..W3 row-folds + permuted FC
        # b_ref : (4, 96)        f32  -- one bias row per layer
        # o_ref : (mt, hidden)   f32
        # p_refs: per-conv-layer VMEM patch scratch (Ho*mt, 4*Kin)

        def leaky(v):
            return jnp.where(v >= 0, v, jnp.float32(NEG_SLOPE) * v)

        def conv_layer(get_row, lay, p_ref):
            H, Kin, Kout = lay["H"], lay["Kin"], lay["Kout"]
            Ho = H // STRIDE
            # Row-granularity im2col: patch row-block ho holds the 4 input
            # rows hi = 2*ho + kh - 1 (kh = 0..3) side by side along lanes;
            # out-of-range rows (padding=1) are written as zeros.
            for ho in range(Ho):
                for kh in range(KK):
                    hi = STRIDE * ho + kh - 1
                    if 0 <= hi < H:
                        blk = get_row(hi)
                    else:
                        blk = jnp.zeros((mt, Kin), jnp.float32)
                    p_ref[ho * mt:(ho + 1) * mt, kh * Kin:(kh + 1) * Kin] = blk
            w = w_ref[lay["w_off"]:lay["w_off"] + KK * Kin, :Kout]
            acc = jnp.dot(p_ref[...], w, preferred_element_type=jnp.float32)
            acc = acc + b_ref[lay["b_idx"]:lay["b_idx"] + 1, :Kout]
            return leaky(acc)           # (Ho*mt, Kout) f32, row-blocks by ho

        # ----- conv stack (activations stay f32 and on-chip) -----
        k0 = layers[0]["Kin"]
        h = conv_layer(lambda hi: x_ref[:, hi * k0:(hi + 1) * k0],
                       layers[0], p_refs[0])
        for lay, p_ref in zip(layers[1:], p_refs[1:]):
            prev = h
            h = conv_layer(
                lambda hi, prev=prev: prev[hi * mt:(hi + 1) * mt, :],
                lay, p_ref)

        # ----- FC: consumes the (h, c, w)-ordered flatten row-block by
        # row-block; the Linear weight was pre-permuted host-side, so no
        # in-kernel transpose is needed. -----
        last = layers[-1]
        ho_last, kout_last = last["H"] // STRIDE, last["Kout"]
        out = b_ref[fc["b_idx"]:fc["b_idx"] + 1, :hidden]       # broadcast
        for r in range(ho_last):
            wr = w_ref[fc["w_off"] + r * kout_last:
                       fc["w_off"] + (r + 1) * kout_last, :hidden]
            out = out + jnp.dot(h[r * mt:(r + 1) * mt, :], wr,
                                preferred_element_type=jnp.float32)
        o_ref[...] = out.astype(o_ref.dtype)

    return kernel


# ---------------------------------------------------------------------------
# Forward wrapper: one pallas_call, M tiled over the grid, weights resident.
# ---------------------------------------------------------------------------
def encoder_forward(wblob, bblob, x_nchw, cfg, mt_max=128):
    """x_nchw: (N, C, H, W) float32 -> (N, hidden) float32."""
    N, C, H, W = x_nchw.shape
    layers, fc = cfg["layers"], cfg["fc"]
    hidden = fc["hidden"]
    assert H == layers[0]["H"] and C * W == layers[0]["Kin"]

    # Layout plumbing outside the kernel (cheap XLA ops): one lane-dense
    # 768-wide vector per image containing rows in (c-major, w-minor) order.
    x_rows = jnp.transpose(x_nchw, (0, 2, 1, 3)).reshape(N, H * C * W)

    mt = min(mt_max, _round_up(N, 8))            # rows per grid step
    n_pad = _round_up(N, mt)
    if n_pad != N:
        x_rows = jnp.pad(x_rows, ((0, n_pad - N), (0, 0)))

    scratch = [pltpu.VMEM(((lay["H"] // STRIDE) * mt, KK * lay["Kin"]),
                          jnp.float32) for lay in layers]

    conv_flops = sum(2 * (lay["H"] // STRIDE) * (KK * lay["Kin"]) * lay["Kout"]
                     for lay in layers)
    fc_in = (layers[-1]["H"] // STRIDE) * layers[-1]["Kout"]
    flops = n_pad * (conv_flops + 2 * fc_in * hidden)
    bytes_accessed = (x_rows.size * x_rows.dtype.itemsize
                      + wblob.size * wblob.dtype.itemsize
                      + bblob.size * bblob.dtype.itemsize
                      + n_pad * hidden * 4)

    out = pl.pallas_call(
        _make_kernel(cfg, mt),
        out_shape=jax.ShapeDtypeStruct((n_pad, hidden), jnp.float32),
        grid=(n_pad // mt,),
        in_specs=[
            pl.BlockSpec((mt, H * C * W), lambda i: (i, 0)),   # M-tiled input
            pl.BlockSpec(wblob.shape, lambda i: (0, 0)),       # resident
            pl.BlockSpec(bblob.shape, lambda i: (0, 0)),       # resident
        ],
        out_specs=pl.BlockSpec((mt, hidden), lambda i: (i, 0)),
        scratch_shapes=scratch,
        compiler_params=pltpu.CompilerParams(
            dimension_semantics=("parallel",)),                # v7x: 2 TCs
        cost_estimate=pl.CostEstimate(flops=int(flops), transcendentals=0,
                                      bytes_accessed=int(bytes_accessed)),
    )(x_rows, wblob, bblob)
    return out[:N]


# ---------------------------------------------------------------------------
# Parameter prep (hoisted out of the forward path, done once).
# ---------------------------------------------------------------------------
def _conv_row_fold(w, b, H, W):
    """Exact refold of Conv2d(k=4, s=2, p=1) as a dense matmul on image rows.

    Row layout (input and output): vec[c * width + x] = act[c, row, x].
    Wl[kh*Cin*W + ci*W + wi, co*Wo + wo] = w[co, ci, kh, wi - 2*wo + 1]
    (zero where kw falls outside [0, 4)); bias row b_row[co*Wo + wo] = b[co].
    Only true conv parameters appear (replicated across Wo); the H/Ho
    structural zeros of a full im2col fold are assembled at run time instead.
    """
    w = np.asarray(w, np.float32)
    b = np.asarray(b, np.float32)
    Cout, Cin, _, _ = w.shape
    Wo = W // STRIDE
    Kin, Kout = Cin * W, Cout * Wo
    Wl = np.zeros((KK * Kin, Kout), np.float32)
    cols = np.arange(Cout) * Wo
    for kh in range(KK):
        for ci in range(Cin):
            for wi in range(W):
                r = kh * Kin + ci * W + wi
                for wo in range(Wo):
                    kw = wi - STRIDE * wo + 1            # padding = 1
                    if 0 <= kw < KK:
                        Wl[r, cols + wo] = w[:, ci, kh, kw]
    return Wl, np.repeat(b, Wo)


def _fc_fold(wf, bf, C, Ho, Wo):
    """Pre-permute the Linear weight so it consumes the kernel's
    (h-major, channel, w) flatten instead of PyTorch's NCHW flatten."""
    wf = np.asarray(wf, np.float32)                      # (hidden, C*Ho*Wo)
    hidden = wf.shape[0]
    W4 = (wf.reshape(hidden, C, Ho, Wo)
            .transpose(2, 1, 3, 0)                       # (Ho, C, Wo, hidden)
            .reshape(Ho * C * Wo, hidden))
    return W4, np.asarray(bf, np.float32)


def pack_params(params, H=16, W=16):
    """Fold + pack all weights ONCE into two contiguous HBM operands:
         wblob (rows, 96) f32 -- conv row-folds + permuted FC weight, stacked
         bblob (L+1, 96) f32  -- one bias row per layer
       plus a static config dict consumed by the kernel builder."""
    mats, biases, layers = [], [], []
    h, w = H, W
    for (cw, cb) in params["conv"]:
        cw_np = np.asarray(cw)
        Wl, br = _conv_row_fold(cw_np, cb, h, w)
        layers.append(dict(H=h, W=w, Cin=cw_np.shape[1], Cout=cw_np.shape[0],
                           Kin=cw_np.shape[1] * w,
                           Kout=cw_np.shape[0] * (w // STRIDE)))
        mats.append(Wl)
        biases.append(br)
        h, w = h // STRIDE, w // STRIDE
    c_last = np.asarray(params["conv"][-1][0]).shape[0]
    W4, b4 = _fc_fold(params["fc"][0], params["fc"][1], c_last, h, w)
    mats.append(W4)
    biases.append(b4)
    hidden = int(W4.shape[1])

    lane = max(m.shape[1] for m in mats)                     # 96
    rows = _round_up(sum(m.shape[0] for m in mats), 8)       # 1152
    wblob = np.zeros((rows, lane), np.float32)
    bblob = np.zeros((len(mats), lane), np.float32)
    offs, r = [], 0
    for i, (m, br) in enumerate(zip(mats, biases)):
        offs.append(r)
        wblob[r:r + m.shape[0], :m.shape[1]] = m
        bblob[i, :br.shape[0]] = br
        r += m.shape[0]
    for i, lay in enumerate(layers):
        lay["w_off"], lay["b_idx"] = offs[i], i
    cfg = dict(layers=tuple(layers),
               fc=dict(w_off=offs[-1], b_idx=len(mats) - 1, hidden=hidden))
    return jnp.asarray(wblob), jnp.asarray(bblob), cfg


# ---------------------------------------------------------------------------
# Deterministic parameter init (shapes follow the PyTorch __init__).
# ---------------------------------------------------------------------------
def init_params(key, depth=3, in_ch=3, H=16, W=16, hidden_dim=32):
    params = {"conv": []}
    c_in = in_ch
    for d in range(depth):
        c_out = 12 * (2 ** d)                            # 12, 24, 48
        key, kw, kb = jax.random.split(key, 3)
        w = jax.random.normal(kw, (c_out, c_in, KK, KK), jnp.float32) * 0.05
        b = jax.random.normal(kb, (c_out,), jnp.float32) * 0.05
        params["conv"].append((w, b))
        c_in = c_out
    conv_dim = c_in * (H // (2 ** depth)) * (W // (2 ** depth))
    key, kw, kb = jax.random.split(key, 3)
    wf = jax.random.normal(kw, (hidden_dim, conv_dim), jnp.float32) * 0.05
    bf = jax.random.normal(kb, (hidden_dim,), jnp.float32) * 0.05
    params["fc"] = (wf, bf)
    return params


# ---------------------------------------------------------------------------
# Pure-NumPy reference of the PyTorch module (f32), for validation only.
# ---------------------------------------------------------------------------
def _reference_forward(params, x_nchw):
    x = np.asarray(x_nchw, np.float32)
    for (w, b) in params["conv"]:
        w = np.asarray(w, np.float32)
        b = np.asarray(b, np.float32)
        N, Cin, H, W = x.shape
        Cout = w.shape[0]
        Ho, Wo = H // 2, W // 2
        xp = np.zeros((N, Cin, H + 2, W + 2), np.float32)
        xp[:, :, 1:-1, 1:-1] = x
        y = np.zeros((N, Cout, Ho, Wo), np.float32)
        for kh in range(KK):
            for kw in range(KK):
                patch = xp[:, :, kh:kh + 2 * Ho:2, kw:kw + 2 * Wo:2]
                y += np.einsum("nchw,oc->nohw", patch, w[:, :, kh, kw])
        y += b[None, :, None, None]
        x = np.where(y >= 0, y, NEG_SLOPE * y)           # LeakyReLU(0.01)
    wf, bf = params["fc"]
    flat = x.reshape(x.shape[0], -1)                     # NCHW flatten
    return flat @ np.asarray(wf, np.float32).T + np.asarray(bf, np.float32)


if __name__ == "__main__":
    key = jax.random.PRNGKey(0)
    key, kx, kx2, kp = jax.random.split(key, 4)

    # Small shapes consistent with the module: channels=3, spatial=16.
    B, C, H, W = 2, 3, 16, 16
    hidden_dim = 32

    params = init_params(kp, depth=3, in_ch=C, H=H, W=W, hidden_dim=hidden_dim)
    wblob, bblob, cfg = pack_params(params, H=H, W=W)    # once, off the hot path

    fwd = jax.jit(lambda wb, bb, xx: encoder_forward(wb, bb, xx, cfg))

    # 1) tiny-batch latency path: single grid step (mt = 8).
    x_small = jax.random.normal(kx, (B, C, H, W), jnp.float32)
    out_small = jax.block_until_ready(fwd(wblob, bblob, x_small))
    assert out_small.shape == (B, hidden_dim), out_small.shape
    np.testing.assert_allclose(np.asarray(out_small),
                               _reference_forward(params, x_small),
                               rtol=2e-2, atol=5e-3)

    # 2) throughput path: M tiled over the grid (2 steps x 128 rows); the
    #    weight/bias blobs are fetched once and stay VMEM-resident.
    B2 = 256
    x_big = jax.random.normal(kx2, (B2, C, H, W), jnp.float32)
    out_big = jax.block_until_ready(fwd(wblob, bblob, x_big))
    assert out_big.shape == (B2, hidden_dim), out_big.shape
    np.testing.assert_allclose(np.asarray(out_big),
                               _reference_forward(params, x_big),
                               rtol=2e-2, atol=5e-3)

    print("KERNEL_OK")
</pallas_src>

<mosaic_0001>
module attributes {stable_mosaic.version = 11 : i64} {
  func.func @kernel(%arg0: i32, %arg1: memref<8x768xf32, #tpu.memory_space<vmem>>, %arg2: memref<1152x96xf32, #tpu.memory_space<vmem>>, %arg3: memref<4x96xf32, #tpu.memory_space<vmem>>, %arg4: memref<8x32xf32, #tpu.memory_space<vmem>>, %arg5: memref<64x192xf32, #tpu.memory_space<vmem>>, %arg6: memref<32x384xf32, #tpu.memory_space<vmem>>, %arg7: memref<16x384xf32, #tpu.memory_space<vmem>>) attributes {dimension_semantics = [#tpu.dimension_semantics<parallel>], iteration_bounds = array<i64: 1>, scalar_prefetch = 0 : i64, scratch_operands = 3 : i64, tpu.core_type = #tpu.core_type<tc>, window_params = [{transform_indices = @transform_0, window_bounds = array<i64: 8, 768>}, {pipeline_mode = #tpu.pipeline_mode<synchronous>, transform_indices = @transform_1, window_bounds = array<i64: 1152, 96>}, {pipeline_mode = #tpu.pipeline_mode<synchronous>, transform_indices = @transform_2, window_bounds = array<i64: 4, 96>}, {transform_indices = @transform_3, window_bounds = array<i64: 8, 32>}]} {
    %cst = arith.constant 0.000000e+00 : f32
    %0 = vector.broadcast %cst : f32 to vector<8x48xf32>
    %c0 = arith.constant 0 : index
    %c0_0 = arith.constant 0 : index
    %1 = vector.load %arg5[%c0, %c0_0] : memref<64x192xf32, #tpu.memory_space<vmem>>, vector<8x48xf32>
    tpu.vector_store %arg5[%c0, %c0_0], %0 {strides = array<i32>} : memref<64x192xf32, #tpu.memory_space<vmem>>, vector<8x48xf32>,
    %c0_1 = arith.constant 0 : index
    %c0_2 = arith.constant 0 : index
    %2 = vector.load %arg1[%c0_1, %c0_2] : memref<8x768xf32, #tpu.memory_space<vmem>>, vector<8x48xf32>
    %c0_3 = arith.constant 0 : index
    %c48 = arith.constant 48 : index
    %3 = vector.load %arg5[%c0_3, %c48] : memref<64x192xf32, #tpu.memory_space<vmem>>, vector<8x48xf32>
    tpu.vector_store %arg5[%c0_3, %c48], %2 {strides = array<i32>} : memref<64x192xf32, #tpu.memory_space<vmem>>, vector<8x48xf32>,
    %c0_4 = arith.constant 0 : index
    %c48_5 = arith.constant 48 : index
    %4 = vector.load %arg1[%c0_4, %c48_5] : memref<8x768xf32, #tpu.memory_space<vmem>>, vector<8x48xf32>
    %c0_6 = arith.constant 0 : index
    %c96 = arith.constant 96 : index
    %5 = vector.load %arg5[%c0_6, %c96] : memref<64x192xf32, #tpu.memory_space<vmem>>, vector<8x48xf32>
    tpu.vector_store %arg5[%c0_6, %c96], %4 {strides = array<i32>} : memref<64x192xf32, #tpu.memory_space<vmem>>, vector<8x48xf32>,
    %c0_7 = arith.constant 0 : index
    %c96_8 = arith.constant 96 : index
    %6 = vector.load %arg1[%c0_7, %c96_8] : memref<8x768xf32, #tpu.memory_space<vmem>>, vector<8x48xf32>
    %c0_9 = arith.constant 0 : index
    %c144 = arith.constant 144 : index
    %7 = vector.load %arg5[%c0_9, %c144] : memref<64x192xf32, #tpu.memory_space<vmem>>, vector<8x48xf32>
    tpu.vector_store %arg5[%c0_9, %c144], %6 {strides = array<i32>} : memref<64x192xf32, #tpu.memory_space<vmem>>, vector<8x48xf32>,
    %c0_10 = arith.constant 0 : index
    %c48_11 = arith.constant 48 : index
    %8 = vector.load %arg1[%c0_10, %c48_11] : memref<8x768xf32, #tpu.memory_space<vmem>>, vector<8x48xf32>
    %c8 = arith.constant 8 : index
    %c0_12 = arith.constant 0 : index
    %9 = vector.load %arg5[%c8, %c0_12] : memref<64x192xf32, #tpu.memory_space<vmem>>, vector<8x48xf32>
    tpu.vector_store %arg5[%c8, %c0_12], %8 {strides = array<i32>} : memref<64x192xf32, #tpu.memory_space<vmem>>, vector<8x48xf32>,
    %c0_13 = arith.constant 0 : index
    %c96_14 = arith.constant 96 : index
    %10 = vector.load %arg1[%c0_13, %c96_14] : memref<8x768xf32, #tpu.memory_space<vmem>>, vector<8x48xf32>
    %c8_15 = arith.constant 8 : index
    %c48_16 = arith.constant 48 : index
    %11 = vector.load %arg5[%c8_15, %c48_16] : memref<64x192xf32, #tpu.memory_space<vmem>>, vector<8x48xf32>
    tpu.vector_store %arg5[%c8_15, %c48_16], %10 {strides = array<i32>} : memref<64x192xf32, #tpu.memory_space<vmem>>, vector<8x48xf32>,
    %c0_17 = arith.constant 0 : index
    %c144_18 = arith.constant 144 : index
    %12 = vector.load %arg1[%c0_17, %c144_18] : memref<8x768xf32, #tpu.memory_space<vmem>>, vector<8x48xf32>
    %c8_19 = arith.constant 8 : index
    %c96_20 = arith.constant 96 : index
    %13 = vector.load %arg5[%c8_19, %c96_20] : memref<64x192xf32, #tpu.memory_space<vmem>>, vector<8x48xf32>
    tpu.vector_store %arg5[%c8_19, %c96_20], %12 {strides = array<i32>} : memref<64x192xf32, #tpu.memory_space<vmem>>, vector<8x48xf32>,
    %c0_21 = arith.constant 0 : index
    %c192 = arith.constant 192 : index
    %14 = vector.load %arg1[%c0_21, %c192] : memref<8x768xf32, #tpu.memory_space<vmem>>, vector<8x48xf32>
    %c8_22 = arith.constant 8 : index
    %c144_23 = arith.constant 144 : index
    %15 = vector.load %arg5[%c8_22, %c144_23] : memref<64x192xf32, #tpu.memory_space<vmem>>, vector<8x48xf32>
    tpu.vector_store %arg5[%c8_22, %c144_23], %14 {strides = array<i32>} : memref<64x192xf32, #tpu.memory_space<vmem>>, vector<8x48xf32>,
    %c0_24 = arith.constant 0 : index
    %c144_25 = arith.constant 144 : index
    %16 = vector.load %arg1[%c0_24, %c144_25] : memref<8x768xf32, #tpu.memory_space<vmem>>, vector<8x48xf32>
    %c16 = arith.constant 16 : index
    %c0_26 = arith.constant 0 : index
    %17 = vector.load %arg5[%c16, %c0_26] : memref<64x192xf32, #tpu.memory_space<vmem>>, vector<8x48xf32>
    tpu.vector_store %arg5[%c16, %c0_26], %16 {strides = array<i32>} : memref<64x192xf32, #tpu.memory_space<vmem>>, vector<8x48xf32>,
    %c0_27 = arith.constant 0 : index
    %c192_28 = arith.constant 192 : index
    %18 = vector.load %arg1[%c0_27, %c192_28] : memref<8x768xf32, #tpu.memory_space<vmem>>, vector<8x48xf32>
    %c16_29 = arith.constant 16 : index
    %c48_30 = arith.constant 48 : index
    %19 = vector.load %arg5[%c16_29, %c48_30] : memref<64x192xf32, #tpu.memory_space<vmem>>, vector<8x48xf32>
    tpu.vector_store %arg5[%c16_29, %c48_30], %18 {strides = array<i32>} : memref<64x192xf32, #tpu.memory_space<vmem>>, vector<8x48xf32>,
    %c0_31 = arith.constant 0 : index
    %c240 = arith.constant 240 : index
    %20 = vector.load %arg1[%c0_31, %c240] : memref<8x768xf32, #tpu.memory_space<vmem>>, vector<8x48xf32>
    %c16_32 = arith.constant 16 : index
    %c96_33 = arith.constant 96 : index
    %21 = vector.load %arg5[%c16_32, %c96_33] : memref<64x192xf32, #tpu.memory_space<vmem>>, vector<8x48xf32>
    tpu.vector_store %arg5[%c16_32, %c96_33], %20 {strides = array<i32>} : memref<64x192xf32, #tpu.memory_space<vmem>>, vector<8x48xf32>,
    %c0_34 = arith.constant 0 : index
    %c288 = arith.constant 288 : index
    %22 = vector.load %arg1[%c0_34, %c288] : memref<8x768xf32, #tpu.memory_space<vmem>>, vector<8x48xf32>
    %c16_35 = arith.constant 16 : index
    %c144_36 = arith.constant 144 : index
    %23 = vector.load %arg5[%c16_35, %c144_36] : memref<64x192xf32, #tpu.memory_space<vmem>>, vector<8x48xf32>
    tpu.vector_store %arg5[%c16_35, %c144_36], %22 {strides = array<i32>} : memref<64x192xf32, #tpu.memory_space<vmem>>, vector<8x48xf32>,
    %c0_37 = arith.constant 0 : index
    %c240_38 = arith.constant 240 : index
    %24 = vector.load %arg1[%c0_37, %c240_38] : memref<8x768xf32, #tpu.memory_space<vmem>>, vector<8x48xf32>
    %c24 = arith.constant 24 : index
    %c0_39 = arith.constant 0 : index
    %25 = vector.load %arg5[%c24, %c0_39] : memref<64x192xf32, #tpu.memory_space<vmem>>, vector<8x48xf32>
    tpu.vector_store %arg5[%c24, %c0_39], %24 {strides = array<i32>} : memref<64x192xf32, #tpu.memory_space<vmem>>, vector<8x48xf32>,
    %c0_40 = arith.constant 0 : index
    %c288_41 = arith.constant 288 : index
    %26 = vector.load %arg1[%c0_40, %c288_41] : memref<8x768xf32, #tpu.memory_space<vmem>>, vector<8x48xf32>
    %c24_42 = arith.constant 24 : index
    %c48_43 = arith.constant 48 : index
    %27 = vector.load %arg5[%c24_42, %c48_43] : memref<64x192xf32, #tpu.memory_space<vmem>>, vector<8x48xf32>
    tpu.vector_store %arg5[%c24_42, %c48_43], %26 {strides = array<i32>} : memref<64x192xf32, #tpu.memory_space<vmem>>, vector<8x48xf32>,
    %c0_44 = arith.constant 0 : index
    %c336 = arith.constant 336 : index
    %28 = vector.load %arg1[%c0_44, %c336] : memref<8x768xf32, #tpu.memory_space<vmem>>, vector<8x48xf32>
    %c24_45 = arith.constant 24 : index
    %c96_46 = arith.constant 96 : index
    %29 = vector.load %arg5[%c24_45, %c96_46] : memref<64x192xf32, #tpu.memory_space<vmem>>, vector<8x48xf32>
    tpu.vector_store %arg5[%c24_45, %c96_46], %28 {strides = array<i32>} : memref<64x192xf32, #tpu.memory_space<vmem>>, vector<8x48xf32>,
    %c0_47 = arith.constant 0 : index
    %c384 = arith.constant 384 : index
    %30 = vector.load %arg1[%c0_47, %c384] : memref<8x768xf32, #tpu.memory_space<vmem>>, vector<8x48xf32>
    %c24_48 = arith.constant 24 : index
    %c144_49 = arith.constant 144 : index
    %31 = vector.load %arg5[%c24_48, %c144_49] : memref<64x192xf32, #tpu.memory_space<vmem>>, vector<8x48xf32>
    tpu.vector_store %arg5[%c24_48, %c144_49], %30 {strides = array<i32>} : memref<64x192xf32, #tpu.memory_space<vmem>>, vector<8x48xf32>,
    %c0_50 = arith.constant 0 : index
    %c336_51 = arith.constant 336 : index
    %32 = vector.load %arg1[%c0_50, %c336_51] : memref<8x768xf32, #tpu.memory_space<vmem>>, vector<8x48xf32>
    %c32 = arith.constant 32 : index
    %c0_52 = arith.constant 0 : index
    %33 = vector.load %arg5[%c32, %c0_52] : memref<64x192xf32, #tpu.memory_space<vmem>>, vector<8x48xf32>
    tpu.vector_store %arg5[%c32, %c0_52], %32 {strides = array<i32>} : memref<64x192xf32, #tpu.memory_space<vmem>>, vector<8x48xf32>,
    %c0_53 = arith.constant 0 : index
    %c384_54 = arith.constant 384 : index
    %34 = vector.load %arg1[%c0_53, %c384_54] : memref<8x768xf32, #tpu.memory_space<vmem>>, vector<8x48xf32>
    %c32_55 = arith.constant 32 : index
    %c48_56 = arith.constant 48 : index
    %35 = vector.load %arg5[%c32_55, %c48_56] : memref<64x192xf32, #tpu.memory_space<vmem>>, vector<8x48xf32>
    tpu.vector_store %arg5[%c32_55, %c48_56], %34 {strides = array<i32>} : memref<64x192xf32, #tpu.memory_space<vmem>>, vector<8x48xf32>,
    %c0_57 = arith.constant 0 : index
    %c432 = arith.constant 432 : index
    %36 = vector.load %arg1[%c0_57, %c432] : memref<8x768xf32, #tpu.memory_space<vmem>>, vector<8x48xf32>
    %c32_58 = arith.constant 32 : index
    %c96_59 = arith.constant 96 : index
    %37 = vector.load %arg5[%c32_58, %c96_59] : memref<64x192xf32, #tpu.memory_space<vmem>>, vector<8x48xf32>
    tpu.vector_store %arg5[%c32_58, %c96_59], %36 {strides = array<i32>} : memref<64x192xf32, #tpu.memory_space<vmem>>, vector<8x48xf32>,
    %c0_60 = arith.constant 0 : index
    %c480 = arith.constant 480 : index
    %38 = vector.load %arg1[%c0_60, %c480] : memref<8x768xf32, #tpu.memory_space<vmem>>, vector<8x48xf32>
    %c32_61 = arith.constant 32 : index
    %c144_62 = arith.constant 144 : index
    %39 = vector.load %arg5[%c32_61, %c144_62] : memref<64x192xf32, #tpu.memory_space<vmem>>, vector<8x48xf32>
    tpu.vector_store %arg5[%c32_61, %c144_62], %38 {strides = array<i32>} : memref<64x192xf32, #tpu.memory_space<vmem>>, vector<8x48xf32>,
    %c0_63 = arith.constant 0 : index
    %c432_64 = arith.constant 432 : index
    %40 = vector.load %arg1[%c0_63, %c432_64] : memref<8x768xf32, #tpu.memory_space<vmem>>, vector<8x48xf32>
    %c40 = arith.constant 40 : index
    %c0_65 = arith.constant 0 : index
    %41 = vector.load %arg5[%c40, %c0_65] : memref<64x192xf32, #tpu.memory_space<vmem>>, vector<8x48xf32>
    tpu.vector_store %arg5[%c40, %c0_65], %40 {strides = array<i32>} : memref<64x192xf32, #tpu.memory_space<vmem>>, vector<8x48xf32>,
    %c0_66 = arith.constant 0 : index
    %c480_67 = arith.constant 480 : index
    %42 = vector.load %arg1[%c0_66, %c480_67] : memref<8x768xf32, #tpu.memory_space<vmem>>, vector<8x48xf32>
    %c40_68 = arith.constant 40 : index
    %c48_69 = arith.constant 48 : index
    %43 = vector.load %arg5[%c40_68, %c48_69] : memref<64x192xf32, #tpu.memory_space<vmem>>, vector<8x48xf32>
    tpu.vector_store %arg5[%c40_68, %c48_69], %42 {strides = array<i32>} : memref<64x192xf32, #tpu.memory_space<vmem>>, vector<8x48xf32>,
    %c0_70 = arith.constant 0 : index
    %c528 = arith.constant 528 : index
    %44 = vector.load %arg1[%c0_70, %c528] : memref<8x768xf32, #tpu.memory_space<vmem>>, vector<8x48xf32>
    %c40_71 = arith.constant 40 : index
    %c96_72 = arith.constant 96 : index
    %45 = vector.load %arg5[%c40_71, %c96_72] : memref<64x192xf32, #tpu.memory_space<vmem>>, vector<8x48xf32>
    tpu.vector_store %arg5[%c40_71, %c96_72], %44 {strides = array<i32>} : memref<64x192xf32, #tpu.memory_space<vmem>>, vector<8x48xf32>,
    %c0_73 = arith.constant 0 : index
    %c576 = arith.constant 576 : index
    %46 = vector.load %arg1[%c0_73, %c576] : memref<8x768xf32, #tpu.memory_space<vmem>>, vector<8x48xf32>
    %c40_74 = arith.constant 40 : index
    %c144_75 = arith.constant 144 : index
    %47 = vector.load %arg5[%c40_74, %c144_75] : memref<64x192xf32, #tpu.memory_space<vmem>>, vector<8x48xf32>
    tpu.vector_store %arg5[%c40_74, %c144_75], %46 {strides = array<i32>} : memref<64x192xf32, #tpu.memory_space<vmem>>, vector<8x48xf32>,
    %c0_76 = arith.constant 0 : index
    %c528_77 = arith.constant 528 : index
    %48 = vector.load %arg1[%c0_76, %c528_77] : memref<8x768xf32, #tpu.memory_space<vmem>>, vector<8x48xf32>
    %c48_78 = arith.constant 48 : index
    %c0_79 = arith.constant 0 : index
    %49 = vector.load %arg5[%c48_78, %c0_79] : memref<64x192xf32, #tpu.memory_space<vmem>>, vector<8x48xf32>
    tpu.vector_store %arg5[%c48_78, %c0_79], %48 {strides = array<i32>} : memref<64x192xf32, #tpu.memory_space<vmem>>, vector<8x48xf32>,
    %c0_80 = arith.constant 0 : index
    %c576_81 = arith.constant 576 : index
    %50 = vector.load %arg1[%c0_80, %c576_81] : memref<8x768xf32, #tpu.memory_space<vmem>>, vector<8x48xf32>
    %c48_82 = arith.constant 48 : index
    %c48_83 = arith.constant 48 : index
    %51 = vector.load %arg5[%c48_82, %c48_83] : memref<64x192xf32, #tpu.memory_space<vmem>>, vector<8x48xf32>
    tpu.vector_store %arg5[%c48_82, %c48_83], %50 {strides = array<i32>} : memref<64x192xf32, #tpu.memory_space<vmem>>, vector<8x48xf32>,
    %c0_84 = arith.constant 0 : index
    %c624 = arith.constant 624 : index
    %52 = vector.load %arg1[%c0_84, %c624] : memref<8x768xf32, #tpu.memory_space<vmem>>, vector<8x48xf32>
    %c48_85 = arith.constant 48 : index
    %c96_86 = arith.constant 96 : index
    %53 = vector.load %arg5[%c48_85, %c96_86] : memref<64x192xf32, #tpu.memory_space<vmem>>, vector<8x48xf32>
    tpu.vector_store %arg5[%c48_85, %c96_86], %52 {strides = array<i32>} : memref<64x192xf32, #tpu.memory_space<vmem>>, vector<8x48xf32>,
    %c0_87 = arith.constant 0 : index
    %c672 = arith.constant 672 : index
    %54 = vector.load %arg1[%c0_87, %c672] : memref<8x768xf32, #tpu.memory_space<vmem>>, vector<8x48xf32>
    %c48_88 = arith.constant 48 : index
    %c144_89 = arith.constant 144 : index
    %55 = vector.load %arg5[%c48_88, %c144_89] : memref<64x192xf32, #tpu.memory_space<vmem>>, vector<8x48xf32>
    tpu.vector_store %arg5[%c48_88, %c144_89], %54 {strides = array<i32>} : memref<64x192xf32, #tpu.memory_space<vmem>>, vector<8x48xf32>,
    %c0_90 = arith.constant 0 : index
    %c624_91 = arith.constant 624 : index
    %56 = vector.load %arg1[%c0_90, %c624_91] : memref<8x768xf32, #tpu.memory_space<vmem>>, vector<8x48xf32>
    %c56 = arith.constant 56 : index
    %c0_92 = arith.constant 0 : index
    %57 = vector.load %arg5[%c56, %c0_92] : memref<64x192xf32, #tpu.memory_space<vmem>>, vector<8x48xf32>
    tpu.vector_store %arg5[%c56, %c0_92], %56 {strides = array<i32>} : memref<64x192xf32, #tpu.memory_space<vmem>>, vector<8x48xf32>,
    %c0_93 = arith.constant 0 : index
    %c672_94 = arith.constant 672 : index
    %58 = vector.load %arg1[%c0_93, %c672_94] : memref<8x768xf32, #tpu.memory_space<vmem>>, vector<8x48xf32>
    %c56_95 = arith.constant 56 : index
    %c48_96 = arith.constant 48 : index
    %59 = vector.load %arg5[%c56_95, %c48_96] : memref<64x192xf32, #tpu.memory_space<vmem>>, vector<8x48xf32>
    tpu.vector_store %arg5[%c56_95, %c48_96], %58 {strides = array<i32>} : memref<64x192xf32, #tpu.memory_space<vmem>>, vector<8x48xf32>,
    %c0_97 = arith.constant 0 : index
    %c720 = arith.constant 720 : index
    %60 = vector.load %arg1[%c0_97, %c720] : memref<8x768xf32, #tpu.memory_space<vmem>>, vector<8x48xf32>
    %c56_98 = arith.constant 56 : index
    %c96_99 = arith.constant 96 : index
    %61 = vector.load %arg5[%c56_98, %c96_99] : memref<64x192xf32, #tpu.memory_space<vmem>>, vector<8x48xf32>
    tpu.vector_store %arg5[%c56_98, %c96_99], %60 {strides = array<i32>} : memref<64x192xf32, #tpu.memory_space<vmem>>, vector<8x48xf32>,
    %cst_100 = arith.constant 0.000000e+00 : f32
    %62 = vector.broadcast %cst_100 : f32 to vector<8x48xf32>
    %c56_101 = arith.constant 56 : index
    %c144_102 = arith.constant 144 : index
    %63 = vector.load %arg5[%c56_101, %c144_102] : memref<64x192xf32, #tpu.memory_space<vmem>>, vector<8x48xf32>
    tpu.vector_store %arg5[%c56_101, %c144_102], %62 {strides = array<i32>} : memref<64x192xf32, #tpu.memory_space<vmem>>, vector<8x48xf32>,
    %c0_103 = arith.constant 0 : index
    %c0_104 = arith.constant 0 : index
    %64 = vector.load %arg2[%c0_103, %c0_104] : memref<1152x96xf32, #tpu.memory_space<vmem>>, vector<192x96xf32>
    %c0_105 = arith.constant 0 : index
    %c0_106 = arith.constant 0 : index
    %65 = vector.load %arg5[%c0_105, %c0_106] : memref<64x192xf32, #tpu.memory_space<vmem>>, vector<64x192xf32>
    %cst_107 = arith.constant dense<0.000000e+00> : vector<64x96xf32>
    %66 = tpu.matmul %65, %64, %cst_107 {dimension_numbers = #tpu.dot_dimension_numbers<[1], [0], [0], [1], [0, 0, 1, 1], [], []>} : vector<64x192xf32>, vector<192x96xf32>, vector<64x96xf32> -> vector<64x96xf32>
    %c0_108 = arith.constant 0 : index
    %c0_109 = arith.constant 0 : index
    %67 = vector.load %arg3[%c0_108, %c0_109] : memref<4x96xf32, #tpu.memory_space<vmem>>, vector<1x96xf32>
    %68 = vector.broadcast %67 : vector<1x96xf32> to vector<64x96xf32>
    %69 = arith.addf %66, %68 : vector<64x96xf32>
    %cst_110 = arith.constant 0.000000e+00 : f32
    %70 = vector.broadcast %cst_110 : f32 to vector<64x96xf32>
    %71 = arith.cmpf oge, %69, %70 : vector<64x96xf32>
    %cst_111 = arith.constant 0.00999999977 : f32
    %72 = vector.broadcast %cst_111 : f32 to vector<64x96xf32>
    %73 = arith.mulf %72, %69 : vector<64x96xf32>
    %74 = arith.select %71, %69, %73 : vector<64x96xi1>, vector<64x96xf32>
    %cst_112 = arith.constant 0.000000e+00 : f32
    %75 = vector.broadcast %cst_112 : f32 to vector<8x96xf32>
    %c0_113 = arith.constant 0 : index
    %c0_114 = arith.constant 0 : index
    %76 = vector.load %arg6[%c0_113, %c0_114] : memref<32x384xf32, #tpu.memory_space<vmem>>, vector<8x96xf32>
    tpu.vector_store %arg6[%c0_113, %c0_114], %75 {strides = array<i32>} : memref<32x384xf32, #tpu.memory_space<vmem>>, vector<8x96xf32>,
    %77 = vector.extract_strided_slice %74 {offsets = [0, 0], sizes = [8, 96], strides = [1, 1]} : vector<64x96xf32> to vector<8x96xf32>
    %c0_115 = arith.constant 0 : index
    %c96_116 = arith.constant 96 : index
    %78 = vector.load %arg6[%c0_115, %c96_116] : memref<32x384xf32, #tpu.memory_space<vmem>>, vector<8x96xf32>
    tpu.vector_store %arg6[%c0_115, %c96_116], %77 {strides = array<i32>} : memref<32x384xf32, #tpu.memory_space<vmem>>, vector<8x96xf32>,
    %79 = vector.extract_strided_slice %74 {offsets = [8, 0], sizes = [8, 96], strides = [1, 1]} : vector<64x96xf32> to vector<8x96xf32>
    %c0_117 = arith.constant 0 : index
    %c192_118 = arith.constant 192 : index
    %80 = vector.load %arg6[%c0_117, %c192_118] : memref<32x384xf32, #tpu.memory_space<vmem>>, vector<8x96xf32>
    tpu.vector_store %arg6[%c0_117, %c192_118], %79 {strides = array<i32>} : memref<32x384xf32, #tpu.memory_space<vmem>>, vector<8x96xf32>,
    %81 = vector.extract_strided_slice %74 {offsets = [16, 0], sizes = [8, 96], strides = [1, 1]} : vector<64x96xf32> to vector<8x96xf32>
    %c0_119 = arith.constant 0 : index
    %c288_120 = arith.constant 288 : index
    %82 = vector.load %arg6[%c0_119, %c288_120] : memref<32x384xf32, #tpu.memory_space<vmem>>, vector<8x96xf32>
    tpu.vector_store %arg6[%c0_119, %c288_120], %81 {strides = array<i32>} : memref<32x384xf32, #tpu.memory_space<vmem>>, vector<8x96xf32>,
    %83 = vector.extract_strided_slice %74 {offsets = [8, 0], sizes = [8, 96], strides = [1, 1]} : vector<64x96xf32> to vector<8x96xf32>
    %c8_121 = arith.constant 8 : index
    %c0_122 = arith.constant 0 : index
    %84 = vector.load %arg6[%c8_121, %c0_122] : memref<32x384xf32, #tpu.memory_space<vmem>>, vector<8x96xf32>
    tpu.vector_store %arg6[%c8_121, %c0_122], %83 {strides = array<i32>} : memref<32x384xf32, #tpu.memory_space<vmem>>, vector<8x96xf32>,
    %85 = vector.extract_strided_slice %74 {offsets = [16, 0], sizes = [8, 96], strides = [1, 1]} : vector<64x96xf32> to vector<8x96xf32>
    %c8_123 = arith.constant 8 : index
    %c96_124 = arith.constant 96 : index
    %86 = vector.load %arg6[%c8_123, %c96_124] : memref<32x384xf32, #tpu.memory_space<vmem>>, vector<8x96xf32>
    tpu.vector_store %arg6[%c8_123, %c96_124], %85 {strides = array<i32>} : memref<32x384xf32, #tpu.memory_space<vmem>>, vector<8x96xf32>,
    %87 = vector.extract_strided_slice %74 {offsets = [24, 0], sizes = [8, 96], strides = [1, 1]} : vector<64x96xf32> to vector<8x96xf32>
    %c8_125 = arith.constant 8 : index
    %c192_126 = arith.constant 192 : index
    %88 = vector.load %arg6[%c8_125, %c192_126] : memref<32x384xf32, #tpu.memory_space<vmem>>, vector<8x96xf32>
    tpu.vector_store %arg6[%c8_125, %c192_126], %87 {strides = array<i32>} : memref<32x384xf32, #tpu.memory_space<vmem>>, vector<8x96xf32>,
    %89 = vector.extract_strided_slice %74 {offsets = [32, 0], sizes = [8, 96], strides = [1, 1]} : vector<64x96xf32> to vector<8x96xf32>
    %c8_127 = arith.constant 8 : index
    %c288_128 = arith.constant 288 : index
    %90 = vector.load %arg6[%c8_127, %c288_128] : memref<32x384xf32, #tpu.memory_space<vmem>>, vector<8x96xf32>
    tpu.vector_store %arg6[%c8_127, %c288_128], %89 {strides = array<i32>} : memref<32x384xf32, #tpu.memory_space<vmem>>, vector<8x96xf32>,
    %91 = vector.extract_strided_slice %74 {offsets = [24, 0], sizes = [8, 96], strides = [1, 1]} : vector<64x96xf32> to vector<8x96xf32>
    %c16_129 = arith.constant 16 : index
    %c0_130 = arith.constant 0 : index
    %92 = vector.load %arg6[%c16_129, %c0_130] : memref<32x384xf32, #tpu.memory_space<vmem>>, vector<8x96xf32>
    tpu.vector_store %arg6[%c16_129, %c0_130], %91 {strides = array<i32>} : memref<32x384xf32, #tpu.memory_space<vmem>>, vector<8x96xf32>,
    %93 = vector.extract_strided_slice %74 {offsets = [32, 0], sizes = [8, 96], strides = [1, 1]} : vector<64x96xf32> to vector<8x96xf32>
    %c16_131 = arith.constant 16 : index
    %c96_132 = arith.constant 96 : index
    %94 = vector.load %arg6[%c16_131, %c96_132] : memref<32x384xf32, #tpu.memory_space<vmem>>, vector<8x96xf32>
    tpu.vector_store %arg6[%c16_131, %c96_132], %93 {strides = array<i32>} : memref<32x384xf32, #tpu.memory_space<vmem>>, vector<8x96xf32>,
    %95 = vector.extract_strided_slice %74 {offsets = [40, 0], sizes = [8, 96], strides = [1, 1]} : vector<64x96xf32> to vector<8x96xf32>
    %c16_133 = arith.constant 16 : index
    %c192_134 = arith.constant 192 : index
    %96 = vector.load %arg6[%c16_133, %c192_134] : memref<32x384xf32, #tpu.memory_space<vmem>>, vector<8x96xf32>
    tpu.vector_store %arg6[%c16_133, %c192_134], %95 {strides = array<i32>} : memref<32x384xf32, #tpu.memory_space<vmem>>, vector<8x96xf32>,
    %97 = vector.extract_strided_slice %74 {offsets = [48, 0], sizes = [8, 96], strides = [1, 1]} : vector<64x96xf32> to vector<8x96xf32>
    %c16_135 = arith.constant 16 : index
    %c288_136 = arith.constant 288 : index
    %98 = vector.load %arg6[%c16_135, %c288_136] : memref<32x384xf32, #tpu.memory_space<vmem>>, vector<8x96xf32>
    tpu.vector_store %arg6[%c16_135, %c288_136], %97 {strides = array<i32>} : memref<32x384xf32, #tpu.memory_space<vmem>>, vector<8x96xf32>,
    %99 = vector.extract_strided_slice %74 {offsets = [40, 0], sizes = [8, 96], strides = [1, 1]} : vector<64x96xf32> to vector<8x96xf32>
    %c24_137 = arith.constant 24 : index
    %c0_138 = arith.constant 0 : index
    %100 = vector.load %arg6[%c24_137, %c0_138] : memref<32x384xf32, #tpu.memory_space<vmem>>, vector<8x96xf32>
    tpu.vector_store %arg6[%c24_137, %c0_138], %99 {strides = array<i32>} : memref<32x384xf32, #tpu.memory_space<vmem>>, vector<8x96xf32>,
    %101 = vector.extract_strided_slice %74 {offsets = [48, 0], sizes = [8, 96], strides = [1, 1]} : vector<64x96xf32> to vector<8x96xf32>
    %c24_139 = arith.constant 24 : index
    %c96_140 = arith.constant 96 : index
    %102 = vector.load %arg6[%c24_139, %c96_140] : memref<32x384xf32, #tpu.memory_space<vmem>>, vector<8x96xf32>
    tpu.vector_store %arg6[%c24_139, %c96_140], %101 {strides = array<i32>} : memref<32x384xf32, #tpu.memory_space<vmem>>, vector<8x96xf32>,
    %103 = vector.extract_strided_slice %74 {offsets = [56, 0], sizes = [8, 96], strides = [1, 1]} : vector<64x96xf32> to vector<8x96xf32>
    %c24_141 = arith.constant 24 : index
    %c192_142 = arith.constant 192 : index
    %104 = vector.load %arg6[%c24_141, %c192_142] : memref<32x384xf32, #tpu.memory_space<vmem>>, vector<8x96xf32>
    tpu.vector_store %arg6[%c24_141, %c192_142], %103 {strides = array<i32>} : memref<32x384xf32, #tpu.memory_space<vmem>>, vector<8x96xf32>,
    %cst_143 = arith.constant 0.000000e+00 : f32
    %105 = vector.broadcast %cst_143 : f32 to vector<8x96xf32>
    %c24_144 = arith.constant 24 : index
    %c288_145 = arith.constant 288 : index
    %106 = vector.load %arg6[%c24_144, %c288_145] : memref<32x384xf32, #tpu.memory_space<vmem>>, vector<8x96xf32>
    tpu.vector_store %arg6[%c24_144, %c288_145], %105 {strides = array<i32>} : memref<32x384xf32, #tpu.memory_space<vmem>>, vector<8x96xf32>,
    %c192_146 = arith.constant 192 : index
    %c0_147 = arith.constant 0 : index
    %107 = vector.load %arg2[%c192_146, %c0_147] : memref<1152x96xf32, #tpu.memory_space<vmem>>, vector<384x96xf32>
    %c0_148 = arith.constant 0 : index
    %c0_149 = arith.constant 0 : index
    %108 = vector.load %arg6[%c0_148, %c0_149] : memref<32x384xf32, #tpu.memory_space<vmem>>, vector<32x384xf32>
    %cst_150 = arith.constant dense<0.000000e+00> : vector<32x96xf32>
    %109 = tpu.matmul %108, %107, %cst_150 {dimension_numbers = #tpu.dot_dimension_numbers<[1], [0], [0], [1], [0, 0, 1, 1], [], []>} : vector<32x384xf32>, vector<384x96xf32>, vector<32x96xf32> -> vector<32x96xf32>
    %c1 = arith.constant 1 : index
    %c0_151 = arith.constant 0 : index
    %110 = vector.load %arg3[%c1, %c0_151] : memref<4x96xf32, #tpu.memory_space<vmem>>, vector<1x96xf32>
    %111 = vector.broadcast %110 : vector<1x96xf32> to vector<32x96xf32>
    %112 = arith.addf %109, %111 : vector<32x96xf32>
    %cst_152 = arith.constant 0.000000e+00 : f32
    %113 = vector.broadcast %cst_152 : f32 to vector<32x96xf32>
    %114 = arith.cmpf oge, %112, %113 : vector<32x96xf32>
    %cst_153 = arith.constant 0.00999999977 : f32
    %115 = vector.broadcast %cst_153 : f32 to vector<32x96xf32>
    %116 = arith.mulf %115, %112 : vector<32x96xf32>
    %117 = arith.select %114, %112, %116 : vector<32x96xi1>, vector<32x96xf32>
    %cst_154 = arith.constant 0.000000e+00 : f32
    %118 = vector.broadcast %cst_154 : f32 to vector<8x96xf32>
    %c0_155 = arith.constant 0 : index
    %c0_156 = arith.constant 0 : index
    %119 = vector.load %arg7[%c0_155, %c0_156] : memref<16x384xf32, #tpu.memory_space<vmem>>, vector<8x96xf32>
    tpu.vector_store %arg7[%c0_155, %c0_156], %118 {strides = array<i32>} : memref<16x384xf32, #tpu.memory_space<vmem>>, vector<8x96xf32>,
    %120 = vector.extract_strided_slice %117 {offsets = [0, 0], sizes = [8, 96], strides = [1, 1]} : vector<32x96xf32> to vector<8x96xf32>
    %c0_157 = arith.constant 0 : index
    %c96_158 = arith.constant 96 : index
    %121 = vector.load %arg7[%c0_157, %c96_158] : memref<16x384xf32, #tpu.memory_space<vmem>>, vector<8x96xf32>
    tpu.vector_store %arg7[%c0_157, %c96_158], %120 {strides = array<i32>} : memref<16x384xf32, #tpu.memory_space<vmem>>, vector<8x96xf32>,
    %122 = vector.extract_strided_slice %117 {offsets = [8, 0], sizes = [8, 96], strides = [1, 1]} : vector<32x96xf32> to vector<8x96xf32>
    %c0_159 = arith.constant 0 : index
    %c192_160 = arith.constant 192 : index
    %123 = vector.load %arg7[%c0_159, %c192_160] : memref<16x384xf32, #tpu.memory_space<vmem>>, vector<8x96xf32>
    tpu.vector_store %arg7[%c0_159, %c192_160], %122 {strides = array<i32>} : memref<16x384xf32, #tpu.memory_space<vmem>>, vector<8x96xf32>,
    %124 = vector.extract_strided_slice %117 {offsets = [16, 0], sizes = [8, 96], strides = [1, 1]} : vector<32x96xf32> to vector<8x96xf32>
    %c0_161 = arith.constant 0 : index
    %c288_162 = arith.constant 288 : index
    %125 = vector.load %arg7[%c0_161, %c288_162] : memref<16x384xf32, #tpu.memory_space<vmem>>, vector<8x96xf32>
    tpu.vector_store %arg7[%c0_161, %c288_162], %124 {strides = array<i32>} : memref<16x384xf32, #tpu.memory_space<vmem>>, vector<8x96xf32>,
    %126 = vector.extract_strided_slice %117 {offsets = [8, 0], sizes = [8, 96], strides = [1, 1]} : vector<32x96xf32> to vector<8x96xf32>
    %c8_163 = arith.constant 8 : index
    %c0_164 = arith.constant 0 : index
    %127 = vector.load %arg7[%c8_163, %c0_164] : memref<16x384xf32, #tpu.memory_space<vmem>>, vector<8x96xf32>
    tpu.vector_store %arg7[%c8_163, %c0_164], %126 {strides = array<i32>} : memref<16x384xf32, #tpu.memory_space<vmem>>, vector<8x96xf32>,
    %128 = vector.extract_strided_slice %117 {offsets = [16, 0], sizes = [8, 96], strides = [1, 1]} : vector<32x96xf32> to vector<8x96xf32>
    %c8_165 = arith.constant 8 : index
    %c96_166 = arith.constant 96 : index
    %129 = vector.load %arg7[%c8_165, %c96_166] : memref<16x384xf32, #tpu.memory_space<vmem>>, vector<8x96xf32>
    tpu.vector_store %arg7[%c8_165, %c96_166], %128 {strides = array<i32>} : memref<16x384xf32, #tpu.memory_space<vmem>>, vector<8x96xf32>,
    %130 = vector.extract_strided_slice %117 {offsets = [24, 0], sizes = [8, 96], strides = [1, 1]} : vector<32x96xf32> to vector<8x96xf32>
    %c8_167 = arith.constant 8 : index
    %c192_168 = arith.constant 192 : index
    %131 = vector.load %arg7[%c8_167, %c192_168] : memref<16x384xf32, #tpu.memory_space<vmem>>, vector<8x96xf32>
    tpu.vector_store %arg7[%c8_167, %c192_168], %130 {strides = array<i32>} : memref<16x384xf32, #tpu.memory_space<vmem>>, vector<8x96xf32>,
    %cst_169 = arith.constant 0.000000e+00 : f32
    %132 = vector.broadcast %cst_169 : f32 to vector<8x96xf32>
    %c8_170 = arith.constant 8 : index
    %c288_171 = arith.constant 288 : index
    %133 = vector.load %arg7[%c8_170, %c288_171] : memref<16x384xf32, #tpu.memory_space<vmem>>, vector<8x96xf32>
    tpu.vector_store %arg7[%c8_170, %c288_171], %132 {strides = array<i32>} : memref<16x384xf32, #tpu.memory_space<vmem>>, vector<8x96xf32>,
    %c576_172 = arith.constant 576 : index
    %c0_173 = arith.constant 0 : index
    %134 = vector.load %arg2[%c576_172, %c0_173] : memref<1152x96xf32, #tpu.memory_space<vmem>>, vector<384x96xf32>
    %c0_174 = arith.constant 0 : index
    %c0_175 = arith.constant 0 : index
    %135 = vector.load %arg7[%c0_174, %c0_175] : memref<16x384xf32, #tpu.memory_space<vmem>>, vector<16x384xf32>
    %cst_176 = arith.constant dense<0.000000e+00> : vector<16x96xf32>
    %136 = tpu.matmul %135, %134, %cst_176 {dimension_numbers = #tpu.dot_dimension_numbers<[1], [0], [0], [1], [0, 0, 1, 1], [], []>} : vector<16x384xf32>, vector<384x96xf32>, vector<16x96xf32> -> vector<16x96xf32>
    %c2 = arith.constant 2 : index
    %c0_177 = arith.constant 0 : index
    %137 = vector.load %arg3[%c2, %c0_177] : memref<4x96xf32, #tpu.memory_space<vmem>>, vector<1x96xf32>
    %138 = vector.broadcast %137 : vector<1x96xf32> to vector<16x96xf32>
    %139 = arith.addf %136, %138 : vector<16x96xf32>
    %cst_178 = arith.constant 0.000000e+00 : f32
    %140 = vector.broadcast %cst_178 : f32 to vector<16x96xf32>
    %141 = arith.cmpf oge, %139, %140 : vector<16x96xf32>
    %cst_179 = arith.constant 0.00999999977 : f32
    %142 = vector.broadcast %cst_179 : f32 to vector<16x96xf32>
    %143 = arith.mulf %142, %139 : vector<16x96xf32>
    %144 = arith.select %141, %139, %143 : vector<16x96xi1>, vector<16x96xf32>
    %c3 = arith.constant 3 : index
    %c0_180 = arith.constant 0 : index
    %145 = vector.load %arg3[%c3, %c0_180] : memref<4x96xf32, #tpu.memory_space<vmem>>, vector<1x32xf32>
    %c960 = arith.constant 960 : index
    %c0_181 = arith.constant 0 : index
    %146 = vector.load %arg2[%c960, %c0_181] : memref<1152x96xf32, #tpu.memory_space<vmem>>, vector<96x32xf32>
    %147 = vector.extract_strided_slice %144 {offsets = [0, 0], sizes = [8, 96], strides = [1, 1]} : vector<16x96xf32> to vector<8x96xf32>
    %cst_182 = arith.constant dense<0.000000e+00> : vector<8x32xf32>
    %148 = tpu.matmul %147, %146, %cst_182 {dimension_numbers = #tpu.dot_dimension_numbers<[1], [0], [0], [1], [0, 0, 1, 1], [], []>} : vector<8x96xf32>, vector<96x32xf32>, vector<8x32xf32> -> vector<8x32xf32>
    %149 = vector.broadcast %145 : vector<1x32xf32> to vector<8x32xf32>
    %150 = arith.addf %149, %148 : vector<8x32xf32>
    %c1056 = arith.constant 1056 : index
    %c0_183 = arith.constant 0 : index
    %151 = vector.load %arg2[%c1056, %c0_183] : memref<1152x96xf32, #tpu.memory_space<vmem>>, vector<96x32xf32>
    %152 = vector.extract_strided_slice %144 {offsets = [8, 0], sizes = [8, 96], strides = [1, 1]} : vector<16x96xf32> to vector<8x96xf32>
    %cst_184 = arith.constant dense<0.000000e+00> : vector<8x32xf32>
    %153 = tpu.matmul %152, %151, %cst_184 {dimension_numbers = #tpu.dot_dimension_numbers<[1], [0], [0], [1], [0, 0, 1, 1], [], []>} : vector<8x96xf32>, vector<96x32xf32>, vector<8x32xf32> -> vector<8x32xf32>
    %154 = arith.addf %150, %153 : vector<8x32xf32>
    %c0_185 = arith.constant 0 : index
    %c0_186 = arith.constant 0 : index
    %155 = vector.load %arg4[%c0_185, %c0_186] : memref<8x32xf32, #tpu.memory_space<vmem>>, vector<8x32xf32>
    tpu.vector_store %arg4[%c0_185, %c0_186], %154 {strides = array<i32>} : memref<8x32xf32, #tpu.memory_space<vmem>>, vector<8x32xf32>,
    return
  }
  func.func @transform_0(%arg0: i32) -> (i32, i32) {
    %c0_i32 = arith.constant 0 : i32
    %c0_i32_0 = arith.constant 0 : i32
    return %arg0, %c0_i32 : i32, i32
  }
  func.func @transform_1(%arg0: i32) -> (i32, i32) {
    %c0_i32 = arith.constant 0 : i32
    %c0_i32_0 = arith.constant 0 : i32
    %c0_i32_1 = arith.constant 0 : i32
    return %c0_i32, %c0_i32_0 : i32, i32
  }
  func.func @transform_2(%arg0: i32) -> (i32, i32) {
    %c0_i32 = arith.constant 0 : i32
    %c0_i32_0 = arith.constant 0 : i32
    %c0_i32_1 = arith.constant 0 : i32
    return %c0_i32, %c0_i32_0 : i32, i32
  }
  func.func @transform_3(%arg0: i32) -> (i32, i32) {
    %c0_i32 = arith.constant 0 : i32
    %c0_i32_0 = arith.constant 0 : i32
    return %arg0, %c0_i32 : i32, i32
  }
}

</mosaic_0001>

<llo_original>
// kernel: _lambda_.1
$region0: #{_lambda_.1}
  #allocation0 [shape = 'u32[]', space=smem, size = 0x4, offset = 0x4, fixed_abs, tag = 'smem constant byte address 0x4 - core index']
  #allocation1 [shape = 'u32[72,128]{1,0:T(1,128)}', space=vmem, size = 0x9000, scoped, tag = 'internal scratch']
  #allocation2 [shape = 'f32[64,192]{1,0:T(8,128)}', space=vmem, size = 0x10000, scoped, tag = 'scratch operand']
  #allocation3 [shape = 'f32[32,384]{1,0:T(8,128)}', space=vmem, size = 0xc000, scoped, tag = 'scratch operand']
  #allocation4 [shape = 'f32[16,384]{1,0:T(8,128)}', space=vmem, size = 0x6000, scoped, tag = 'scratch operand']
  %s0 = inlined_call_operand.vmem [shape: f32[8,768], index: 0, kind: input, shape index: {}]
  %s1 = inlined_call_operand.vmem [shape: f32[1152,96], index: 1, kind: input, shape index: {}]
  %s2 = inlined_call_operand.vmem [shape: f32[4,96], index: 2, kind: input, shape index: {}]
  %s3 = inlined_call_operand.vmem [shape: f32[8,32], index: 3, kind: output, shape index: {}]
  %s4 = sld [smem:[#allocation0]]
  $region22: #{_lambda_.1} parent=0
    _
  %s6 = ssub.s32 1, %s4
  %s7 = scalar_select 0, %s6, %s4
  // Predicated region
  $region2: #{_lambda_.1} parent=0 // pred_check
    _
  $region3: #{_lambda_.1} parent=0 // pred_check_branch
    %9 = sbr.rel (0) target = $region5
  $region4: #{_lambda_.1} parent=0 // pred_region
    _
  $region5: #{_lambda_.1} parent=0 // pred_fallthru
    _
  // Predicated region
  $region6: #{_lambda_.1} parent=0 // pred_check
    _
  $region7: #{_lambda_.1} parent=0 // pred_check_branch
    %11 = sbr.rel (0) target = $region9
  $region8: #{_lambda_.1} parent=0 // pred_region
    _
  $region9: #{_lambda_.1} parent=0 // pred_fallthru
    _
  // Predicated region
  $region10: #{_lambda_.1} parent=0 // pred_check
    _
  $region11: #{_lambda_.1} parent=0 // pred_check_branch
    %13 = sbr.rel (0) target = $region13
  $region12: #{_lambda_.1} parent=0 // pred_region
    _
  $region13: #{_lambda_.1} parent=0 // pred_fallthru
    _
  %vm14 = vcmask 392192
  %15 = vst.msk [vmem:[#allocation2] sm:$0xff] %vm14, 0.0
  %v16 = vld [vmem:[%s0] sm:$0xff]
  %18 = vrot.lane.b32.xlu0 %v16, 48
  %v19 = vpop.permute.xlu0 %18
  %vm21 = vcmask 785792
  %22 = vst.msk [vmem:[#allocation2] sm:$0xff] %vm21, %v19
  %v23 = vld [vmem:[%s0] sm:$0xff]
  %25 = vrot.lane.b32.xlu0 %v23, 48
  %v26 = vpop.permute.xlu0 %25
  %vm28 = vcmask 1048320
  %29 = vst.msk [vmem:[#allocation2] sm:$0xff] %vm28, %v26
  %vm30 = vcmask 130048
  %31 = vst.msk [vmem:[#allocation2 + $0x8] sm:$0xff] %vm30, %v26
  %v32 = vld [vmem:[%s0] sm:$0xff]
  %v33 = vld [vmem:[%s0 + $0x8] sm:$0xff]
  %36 = vrot.lane.b32.xlu0 %v32, 48
  %v37 = vpop.permute.xlu0 %36
  %38 = vrot.lane.b32.xlu0 %v33, 48
  %v39 = vpop.permute.xlu0 %38
  %v40 = vsel %vm14, %v37, %v39
  %vm42 = vcmask 523392
  %43 = vst.msk [vmem:[#allocation2 + $0x8] sm:$0xff] %vm42, %v40
  %v44 = vld [vmem:[%s0] sm:$0xff]
  %46 = vrot.lane.b32.xlu0 %v44, 80
  %v47 = vpop.permute.xlu0 %46
  %49 = vst.msk [vmem:[#allocation2 + $0x10] sm:$0xff] %vm14, %v47
  %v50 = vld [vmem:[%s0] sm:$0xff]
  %v51 = vld [vmem:[%s0 + $0x8] sm:$0xff]
  %54 = vrot.lane.b32.xlu0 %v50, 80
  %v55 = vpop.permute.xlu0 %54
  %56 = vrot.lane.b32.xlu0 %v51, 80
  %v57 = vpop.permute.xlu0 %56
  %vm58 = vcmask 654336
  %v59 = vsel %vm58, %v55, %v57
  %61 = vst.msk [vmem:[#allocation2 + $0x10] sm:$0xff] %vm21, %v59
  %v62 = vld [vmem:[%s0 + $0x8] sm:$0xff]
  %64 = vrot.lane.b32.xlu0 %v62, 80
  %v65 = vpop.permute.xlu0 %64
  %67 = vst.msk [vmem:[#allocation2 + $0x10] sm:$0xff] %vm28, %v65
  %68 = vst.msk [vmem:[#allocation2 + $0x18] sm:$0xff] %vm30, %v65
  %v69 = vld [vmem:[%s0 + $0x8] sm:$0xff]
  %71 = vrot.lane.b32.xlu0 %v69, 80
  %v72 = vpop.permute.xlu0 %71
  %74 = vst.msk [vmem:[#allocation2 + $0x18] sm:$0xff] %vm42, %v72
  %v75 = vld [vmem:[%s0 + $0x8] sm:$0xff]
  %77 = vrot.lane.b32.xlu0 %v75, 112
  %v78 = vpop.permute.xlu0 %77
  %80 = vst.msk [vmem:[#allocation2 + $0x20] sm:$0xff] %vm14, %v78
  %v81 = vld [vmem:[%s0 + $0x8] sm:$0xff]
  %83 = vrot.lane.b32.xlu0 %v81, 112
  %v84 = vpop.permute.xlu0 %83
  %86 = vst.msk [vmem:[#allocation2 + $0x20] sm:$0xff] %vm21, %v84
  %v87 = vld [vmem:[%s0 + $0x8] sm:$0xff]
  %v88 = vld [vmem:[%s0 + $0x10] sm:$0xff]
  %91 = vrot.lane.b32.xlu0 %v87, 112
  %v92 = vpop.permute.xlu0 %91
  %93 = vrot.lane.b32.xlu0 %v88, 112
  %v94 = vpop.permute.xlu0 %93
  %vm95 = vcmask 916480
  %v96 = vsel %vm95, %v92, %v94
  %99 = vst.msk [vmem:[#allocation2 + $0x20] sm:$0xff] %vm28, %v96
  %100 = vst.msk [vmem:[#allocation2 + $0x28] sm:$0xff] %vm30, %v94
  %v101 = vld [vmem:[%s0 + $0x10] sm:$0xff]
  %103 = vrot.lane.b32.xlu0 %v101, 112
  %v104 = vpop.permute.xlu0 %103
  %106 = vst.msk [vmem:[#allocation2 + $0x28] sm:$0xff] %vm42, %v104
  %v107 = vld [vmem:[%s0 + $0x8] sm:$0xff]
  %v108 = vld [vmem:[%s0 + $0x10] sm:$0xff]
  %111 = vrot.lane.b32.xlu0 %v107, 16
  %v112 = vpop.permute.xlu0 %111
  %113 = vrot.lane.b32.xlu0 %v108, 16
  %v114 = vpop.permute.xlu0 %113
  %v115 = vsel %vm30, %v112, %v114
  %117 = vst.msk [vmem:[#allocation2 + $0x30] sm:$0xff] %vm14, %v115
  %v118 = vld [vmem:[%s0 + $0x10] sm:$0xff]
  %120 = vrot.lane.b32.xlu0 %v118, 16
  %v121 = vpop.permute.xlu0 %120
  %123 = vst.msk [vmem:[#allocation2 + $0x30] sm:$0xff] %vm21, %v121
  %v124 = vld [vmem:[%s0 + $0x10] sm:$0xff]
  %126 = vrot.lane.b32.xlu0 %v124, 16
  %v127 = vpop.permute.xlu0 %126
  %129 = vst.msk [vmem:[#allocation2 + $0x30] sm:$0xff] %vm28, %v127
  %130 = vst.msk [vmem:[#allocation2 + $0x38] sm:$0xff] %vm30, %v127
  %v131 = vld [vmem:[%s0 + $0x18] sm:$0xff]
  %133 = vrot.lane.b32.xlu0 %v131, 16
  %v134 = vpop.permute.xlu0 %133
  %136 = vst.msk [vmem:[#allocation2 + $0x38] sm:$0xff] %vm42, %v134
  %v137 = vld [vmem:[%s0 + $0x10] sm:$0xff]
  %139 = vrot.lane.b32.xlu0 %v137, 48
  %v140 = vpop.permute.xlu0 %139
  %142 = vst.msk [vmem:[#allocation2 + $0x40] sm:$0xff] %vm14, %v140
  %v143 = vld [vmem:[%s0 + $0x18] sm:$0xff]
  %145 = vrot.lane.b32.xlu0 %v143, 48
  %v146 = vpop.permute.xlu0 %145
  %148 = vst.msk [vmem:[#allocation2 + $0x40] sm:$0xff] %vm21, %v146
  %v149 = vld [vmem:[%s0 + $0x18] sm:$0xff]
  %151 = vrot.lane.b32.xlu0 %v149, 48
  %v152 = vpop.permute.xlu0 %151
  %154 = vst.msk [vmem:[#allocation2 + $0x40] sm:$0xff] %vm28, %v152
  %155 = vst.msk [vmem:[#allocation2 + $0x48] sm:$0xff] %vm30, %v152
  %v156 = vld [vmem:[%s0 + $0x18] sm:$0xff]
  %v157 = vld [vmem:[%s0 + $0x20] sm:$0xff]
  %160 = vrot.lane.b32.xlu0 %v156, 48
  %v161 = vpop.permute.xlu0 %160
  %162 = vrot.lane.b32.xlu0 %v157, 48
  %v163 = vpop.permute.xlu0 %162
  %v164 = vsel %vm14, %v161, %v163
  %166 = vst.msk [vmem:[#allocation2 + $0x48] sm:$0xff] %vm42, %v164
  %v167 = vld [vmem:[%s0 + $0x18] sm:$0xff]
  %169 = vrot.lane.b32.xlu0 %v167, 80
  %v170 = vpop.permute.xlu0 %169
  %172 = vst.msk [vmem:[#allocation2 + $0x50] sm:$0xff] %vm14, %v170
  %v173 = vld [vmem:[%s0 + $0x18] sm:$0xff]
  %v174 = vld [vmem:[%s0 + $0x20] sm:$0xff]
  %177 = vrot.lane.b32.xlu0 %v173, 80
  %v178 = vpop.permute.xlu0 %177
  %179 = vrot.lane.b32.xlu0 %v174, 80
  %v180 = vpop.permute.xlu0 %179
  %v181 = vsel %vm58, %v178, %v180
  %183 = vst.msk [vmem:[#allocation2 + $0x50] sm:$0xff] %vm21, %v181
  %v184 = vld [vmem:[%s0 + $0x20] sm:$0xff]
  %186 = vrot.lane.b32.xlu0 %v184, 80
  %v187 = vpop.permute.xlu0 %186
  %189 = vst.msk [vmem:[#allocation2 + $0x50] sm:$0xff] %vm28, %v187
  %190 = vst.msk [vmem:[#allocation2 + $0x58] sm:$0xff] %vm30, %v187
  %v191 = vld [vmem:[%s0 + $0x20] sm:$0xff]
  %193 = vrot.lane.b32.xlu0 %v191, 80
  %v194 = vpop.permute.xlu0 %193
  %196 = vst.msk [vmem:[#allocation2 + $0x58] sm:$0xff] %vm42, %v194
  %v197 = vld [vmem:[%s0 + $0x20] sm:$0xff]
  %199 = vrot.lane.b32.xlu0 %v197, 112
  %v200 = vpop.permute.xlu0 %199
  %202 = vst.msk [vmem:[#allocation2 + $0x60] sm:$0xff] %vm14, %v200
  %v203 = vld [vmem:[%s0 + $0x20] sm:$0xff]
  %205 = vrot.lane.b32.xlu0 %v203, 112
  %v206 = vpop.permute.xlu0 %205
  %208 = vst.msk [vmem:[#allocation2 + $0x60] sm:$0xff] %vm21, %v206
  %v209 = vld [vmem:[%s0 + $0x20] sm:$0xff]
  %v210 = vld [vmem:[%s0 + $0x28] sm:$0xff]
  %213 = vrot.lane.b32.xlu0 %v209, 112
  %v214 = vpop.permute.xlu0 %213
  %215 = vrot.lane.b32.xlu0 %v210, 112
  %v216 = vpop.permute.xlu0 %215
  %v217 = vsel %vm95, %v214, %v216
  %220 = vst.msk [vmem:[#allocation2 + $0x60] sm:$0xff] %vm28, %v217
  %221 = vst.msk [vmem:[#allocation2 + $0x68] sm:$0xff] %vm30, %v216
  %v222 = vld [vmem:[%s0 + $0x28] sm:$0xff]
  %224 = vrot.lane.b32.xlu0 %v222, 112
  %v225 = vpop.permute.xlu0 %224
  %227 = vst.msk [vmem:[#allocation2 + $0x68] sm:$0xff] %vm42, %v225
  %v228 = vld [vmem:[%s0 + $0x20] sm:$0xff]
  %v229 = vld [vmem:[%s0 + $0x28] sm:$0xff]
  %232 = vrot.lane.b32.xlu0 %v228, 16
  %v233 = vpop.permute.xlu0 %232
  %234 = vrot.lane.b32.xlu0 %v229, 16
  %v235 = vpop.permute.xlu0 %234
  %v236 = vsel %vm30, %v233, %v235
  %238 = vst.msk [vmem:[#allocation2 + $0x70] sm:$0xff] %vm14, %v236
  %v239 = vld [vmem:[%s0 + $0x28] sm:$0xff]
  %241 = vrot.lane.b32.xlu0 %v239, 16
  %v242 = vpop.permute.xlu0 %241
  %244 = vst.msk [vmem:[#allocation2 + $0x70] sm:$0xff] %vm21, %v242
  %v245 = vld [vmem:[%s0 + $0x28] sm:$0xff]
  %247 = vrot.lane.b32.xlu0 %v245, 16
  %v248 = vpop.permute.xlu0 %247
  %250 = vst.msk [vmem:[#allocation2 + $0x70] sm:$0xff] %vm28, %v248
  %251 = vst.msk [vmem:[#allocation2 + $0x78] sm:$0xff] %vm30, %v248
  %252 = vst.msk [vmem:[#allocation2 + $0x78] sm:$0xff] %vm42, 0.0
  %v253 = vld [vmem:[%s1] sm:$0xff]
  %v254 = vld [vmem:[%s1 + $0x8] sm:$0xff]
  %v255 = vld [vmem:[%s1 + $0x10] sm:$0xff]
  %v256 = vld [vmem:[%s1 + $0x18] sm:$0xff]
  %v257 = vld [vmem:[%s1 + $0x20] sm:$0xff]
  %v258 = vld [vmem:[%s1 + $0x28] sm:$0xff]
  %v259 = vld [vmem:[%s1 + $0x30] sm:$0xff]
  %v260 = vld [vmem:[%s1 + $0x38] sm:$0xff]
  %v261 = vld [vmem:[%s1 + $0x40] sm:$0xff]
  %v262 = vld [vmem:[%s1 + $0x48] sm:$0xff]
  %v263 = vld [vmem:[%s1 + $0x50] sm:$0xff]
  %v264 = vld [vmem:[%s1 + $0x58] sm:$0xff]
  %v265 = vld [vmem:[%s1 + $0x60] sm:$0xff]
  %v266 = vld [vmem:[%s1 + $0x68] sm:$0xff]
  %v267 = vld [vmem:[%s1 + $0x70] sm:$0xff]
  %v268 = vld [vmem:[%s1 + $0x78] sm:$0xff]
  %v269 = vld [vmem:[%s1 + $0x80] sm:$0xff]
  %v270 = vld [vmem:[%s1 + $0x88] sm:$0xff]
  %v271 = vld [vmem:[%s1 + $0x90] sm:$0xff]
  %v272 = vld [vmem:[%s1 + $0x98] sm:$0xff]
  %v273 = vld [vmem:[%s1 + $0xa0] sm:$0xff]
  %v274 = vld [vmem:[%s1 + $0xa8] sm:$0xff]
  %v275 = vld [vmem:[%s1 + $0xb0] sm:$0xff]
  %v276 = vld [vmem:[%s1 + $0xb8] sm:$0xff]
  %v277 = vld [vmem:[#allocation2] sm:$0xff]
  %v278 = vld [vmem:[#allocation2 + $0x8] sm:$0xff]
  %v279 = vld [vmem:[#allocation2 + $0x10] sm:$0xff]
  %v280 = vld [vmem:[#allocation2 + $0x18] sm:$0xff]
  %v281 = vld [vmem:[#allocation2 + $0x20] sm:$0xff]
  %v282 = vld [vmem:[#allocation2 + $0x28] sm:$0xff]
  %v283 = vld [vmem:[#allocation2 + $0x30] sm:$0xff]
  %v284 = vld [vmem:[#allocation2 + $0x38] sm:$0xff]
  %v285 = vld [vmem:[#allocation2 + $0x40] sm:$0xff]
  %v286 = vld [vmem:[#allocation2 + $0x48] sm:$0xff]
  %v287 = vld [vmem:[#allocation2 + $0x50] sm:$0xff]
  %v288 = vld [vmem:[#allocation2 + $0x58] sm:$0xff]
  %v289 = vld [vmem:[#allocation2 + $0x60] sm:$0xff]
  %v290 = vld [vmem:[#allocation2 + $0x68] sm:$0xff]
  %v291 = vld [vmem:[#allocation2 + $0x70] sm:$0xff]
  %v292 = vld [vmem:[#allocation2 + $0x78] sm:$0xff]
  %v293 = vld [vmem:[%s2] sm:$0x1]
  %v294 = vperm.slane %v293, 0
  %vm295 = vcmask 523264
  %v297 = vsel %vm295, %v278, 0
  %v300 = vsel %vm295, %v280, 0
  %v303 = vsel %vm295, %v282, 0
  %v306 = vsel %vm295, %v284, 0
  %v309 = vsel %vm295, %v286, 0
  %v312 = vsel %vm295, %v288, 0
  %v315 = vsel %vm295, %v290, 0
  %v318 = vsel %vm295, %v292, 0
  %320 = vmatpush.msra.mxu0 %v268
  %321 = vmatpush.msra.mxu0 %v267
  %322 = vmatpush.msra.mxu0 %v266
  %323 = vmatpush.msra.mxu0 %v265
  %324 = vmatpush.msra.mxu0 %v264
  %325 = vmatpush.msra.mxu0 %v263
  %326 = vmatpush.msra.mxu0 %v262
  %327 = vmatpush.msra.mxu0 %v261
  %328 = vmatpush.msra.mxu0 %v260
  %329 = vmatpush.msra.mxu0 %v259
  %330 = vmatpush.msra.mxu0 %v258
  %331 = vmatpush.msra.mxu0 %v257
  %332 = vmatpush.msra.mxu0 %v256
  %333 = vmatpush.msra.mxu0 %v255
  %334 = vmatpush.msra.mxu0 %v254
  %335 = vmatpush.msra.mxu0 %v253
  %336 = vmatmul.f32.gmra.mxu0 %v277
  %v337 = vpop.f32.mrf.mxu0
  %v338 = vadd.f32 %v294, %v337
  %339 = vmatmul.f32.gmra.mxu0 %v279
  %v340 = vpop.f32.mrf.mxu0
  %v341 = vadd.f32 %v294, %v340
  %342 = vmatmul.f32.gmra.mxu0 %v281
  %v343 = vpop.f32.mrf.mxu0
  %v344 = vadd.f32 %v294, %v343
  %345 = vmatmul.f32.gmra.mxu0 %v283
  %v346 = vpop.f32.mrf.mxu0
  %v347 = vadd.f32 %v294, %v346
  %348 = vmatmul.f32.gmra.mxu0 %v285
  %v349 = vpop.f32.mrf.mxu0
  %v350 = vadd.f32 %v294, %v349
  %351 = vmatmul.f32.gmra.mxu0 %v287
  %v352 = vpop.f32.mrf.mxu0
  %v353 = vadd.f32 %v294, %v352
  %354 = vmatmul.f32.gmra.mxu0 %v289
  %v355 = vpop.f32.mrf.mxu0
  %v356 = vadd.f32 %v294, %v355
  %357 = vmatmul.f32.gmra.mxu0 %v291
  %v358 = vpop.f32.mrf.mxu0
  %v359 = vadd.f32 %v294, %v358
  %360 = vdwg.mxu0
  %361 = vmatpush.msra.mxu0 0.0
  %362 = vmatpush.msra.mxu0 0.0
  %363 = vmatpush.msra.mxu0 0.0
  %364 = vmatpush.msra.mxu0 0.0
  %365 = vmatpush.msra.mxu0 0.0
  %366 = vmatpush.msra.mxu0 0.0
  %367 = vmatpush.msra.mxu0 0.0
  %368 = vmatpush.msra.mxu0 0.0
  %369 = vmatpush.msra.mxu0 %v276
  %370 = vmatpush.msra.mxu0 %v275
  %371 = vmatpush.msra.mxu0 %v274
  %372 = vmatpush.msra.mxu0 %v273
  %373 = vmatpush.msra.mxu0 %v272
  %374 = vmatpush.msra.mxu0 %v271
  %375 = vmatpush.msra.mxu0 %v270
  %376 = vmatpush.msra.mxu0 %v269
  %377 = vmatmul.f32.gmra.mxu0 %v297
  %v378 = vpop.f32.mrf.mxu0
  %v379 = vadd.f32 %v338, %v378
  %380 = vmatmul.f32.gmra.mxu0 %v300
  %v381 = vpop.f32.mrf.mxu0
  %v382 = vadd.f32 %v341, %v381
  %383 = vmatmul.f32.gmra.mxu0 %v303
  %v384 = vpop.f32.mrf.mxu0
  %v385 = vadd.f32 %v344, %v384
  %386 = vmatmul.f32.gmra.mxu0 %v306
  %v387 = vpop.f32.mrf.mxu0
  %v388 = vadd.f32 %v347, %v387
  %389 = vmatmul.f32.gmra.mxu0 %v309
  %v390 = vpop.f32.mrf.mxu0
  %v391 = vadd.f32 %v350, %v390
  %392 = vmatmul.f32.gmra.mxu0 %v312
  %v393 = vpop.f32.mrf.mxu0
  %v394 = vadd.f32 %v353, %v393
  %395 = vmatmul.f32.gmra.mxu0 %v315
  %v396 = vpop.f32.mrf.mxu0
  %v397 = vadd.f32 %v356, %v396
  %398 = vmatmul.f32.gmra.mxu0 %v318
  %v399 = vpop.f32.mrf.mxu0
  %v400 = vadd.f32 %v359, %v399
  %401 = vdwg.mxu0
  %vm402 = vcmp.ge.f32.partialorder %v379, 0.0
  %vm403 = vcmp.ge.f32.partialorder %v382, 0.0
  %vm404 = vcmp.ge.f32.partialorder %v385, 0.0
  %vm405 = vcmp.ge.f32.partialorder %v388, 0.0
  %vm406 = vcmp.ge.f32.partialorder %v391, 0.0
  %vm407 = vcmp.ge.f32.partialorder %v394, 0.0
  %vm408 = vcmp.ge.f32.partialorder %v397, 0.0
  %vm409 = vcmp.ge.f32.partialorder %v400, 0.0
  %v410 = vmul.f32 %v379, 0.01
  %v411 = vmul.f32 %v382, 0.01
  %v412 = vmul.f32 %v385, 0.01
  %v413 = vmul.f32 %v388, 0.01
  %v414 = vmul.f32 %v391, 0.01
  %v415 = vmul.f32 %v394, 0.01
  %v416 = vmul.f32 %v397, 0.01
  %v417 = vmul.f32 %v400, 0.01
  %v418 = vsel %vm402, %v379, %v410
  %v419 = vsel %vm403, %v382, %v411
  %v420 = vsel %vm404, %v385, %v412
  %v421 = vsel %vm405, %v388, %v413
  %v422 = vsel %vm406, %v391, %v414
  %v423 = vsel %vm407, %v394, %v415
  %v424 = vsel %vm408, %v397, %v416
  %v425 = vsel %vm409, %v400, %v417
  %vm426 = vcmask 785408
  %427 = vst.msk [vmem:[#allocation3] sm:$0xff] %vm426, 0.0
  %429 = vrot.lane.b32.xlu0 %v418, 96
  %v430 = vpop.permute.xlu0 %429
  %432 = vst.msk [vmem:[#allocation3] sm:$0xff] %vm28, %v430
  %433 = vst.msk [vmem:[#allocation3 + $0x8] sm:$0xff] %vm295, %v430
  %435 = vrot.lane.b32.xlu0 %v419, 64
  %v436 = vpop.permute.xlu0 %435
  %vm438 = vcmask 1048064
  %439 = vst.msk [vmem:[#allocation3 + $0x8] sm:$0xff] %vm438, %v436
  %vm440 = vcmask 261120
  %441 = vst.msk [vmem:[#allocation3 + $0x10] sm:$0xff] %vm440, %v436
  %443 = vrot.lane.b32.xlu0 %v420, 32
  %v444 = vpop.permute.xlu0 %443
  %vm446 = vcmask 1047808
  %447 = vst.msk [vmem:[#allocation3 + $0x10] sm:$0xff] %vm446, %v444
  %448 = vst.msk [vmem:[#allocation3 + $0x18] sm:$0xff] %vm426, %v419
  %449 = vrot.lane.b32.xlu0 %v420, 96
  %v450 = vpop.permute.xlu0 %449
  %452 = vst.msk [vmem:[#allocation3 + $0x18] sm:$0xff] %vm28, %v450
  %453 = vst.msk [vmem:[#allocation3 + $0x20] sm:$0xff] %vm295, %v450
  %455 = vrot.lane.b32.xlu0 %v421, 64
  %v456 = vpop.permute.xlu0 %455
  %458 = vst.msk [vmem:[#allocation3 + $0x20] sm:$0xff] %vm438, %v456
  %459 = vst.msk [vmem:[#allocation3 + $0x28] sm:$0xff] %vm440, %v456
  %461 = vrot.lane.b32.xlu0 %v422, 32
  %v462 = vpop.permute.xlu0 %461
  %464 = vst.msk [vmem:[#allocation3 + $0x28] sm:$0xff] %vm446, %v462
  %465 = vst.msk [vmem:[#allocation3 + $0x30] sm:$0xff] %vm426, %v421
  %466 = vrot.lane.b32.xlu0 %v422, 96
  %v467 = vpop.permute.xlu0 %466
  %469 = vst.msk [vmem:[#allocation3 + $0x30] sm:$0xff] %vm28, %v467
  %470 = vst.msk [vmem:[#allocation3 + $0x38] sm:$0xff] %vm295, %v467
  %472 = vrot.lane.b32.xlu0 %v423, 64
  %v473 = vpop.permute.xlu0 %472
  %475 = vst.msk [vmem:[#allocation3 + $0x38] sm:$0xff] %vm438, %v473
  %476 = vst.msk [vmem:[#allocation3 + $0x40] sm:$0xff] %vm440, %v473
  %478 = vrot.lane.b32.xlu0 %v424, 32
  %v479 = vpop.permute.xlu0 %478
  %481 = vst.msk [vmem:[#allocation3 + $0x40] sm:$0xff] %vm446, %v479
  %482 = vst.msk [vmem:[#allocation3 + $0x48] sm:$0xff] %vm426, %v423
  %483 = vrot.lane.b32.xlu0 %v424, 96
  %v484 = vpop.permute.xlu0 %483
  %486 = vst.msk [vmem:[#allocation3 + $0x48] sm:$0xff] %vm28, %v484
  %487 = vst.msk [vmem:[#allocation3 + $0x50] sm:$0xff] %vm295, %v484
  %489 = vrot.lane.b32.xlu0 %v425, 64
  %v490 = vpop.permute.xlu0 %489
  %492 = vst.msk [vmem:[#allocation3 + $0x50] sm:$0xff] %vm438, %v490
  %493 = vst.msk [vmem:[#allocation3 + $0x58] sm:$0xff] %vm440, %v490
  %494 = vst.msk [vmem:[#allocation3 + $0x58] sm:$0xff] %vm446, 0.0
  %v495 = vld [vmem:[%s1 + $0xc0] sm:$0xff]
  %v496 = vld [vmem:[%s1 + $0xc8] sm:$0xff]
  %v497 = vld [vmem:[%s1 + $0xd0] sm:$0xff]
  %v498 = vld [vmem:[%s1 + $0xd8] sm:$0xff]
  %v499 = vld [vmem:[%s1 + $0xe0] sm:$0xff]
  %v500 = vld [vmem:[%s1 + $0xe8] sm:$0xff]
  %v501 = vld [vmem:[%s1 + $0xf0] sm:$0xff]
  %v502 = vld [vmem:[%s1 + $0xf8] sm:$0xff]
  %v503 = vld [vmem:[%s1 + $0x100] sm:$0xff]
  %v504 = vld [vmem:[%s1 + $0x108] sm:$0xff]
  %v505 = vld [vmem:[%s1 + $0x110] sm:$0xff]
  %v506 = vld [vmem:[%s1 + $0x118] sm:$0xff]
  %v507 = vld [vmem:[%s1 + $0x120] sm:$0xff]
  %v508 = vld [vmem:[%s1 + $0x128] sm:$0xff]
  %v509 = vld [vmem:[%s1 + $0x130] sm:$0xff]
  %v510 = vld [vmem:[%s1 + $0x138] sm:$0xff]
  %v511 = vld [vmem:[%s1 + $0x140] sm:$0xff]
  %v512 = vld [vmem:[%s1 + $0x148] sm:$0xff]
  %v513 = vld [vmem:[%s1 + $0x150] sm:$0xff]
  %v514 = vld [vmem:[%s1 + $0x158] sm:$0xff]
  %v515 = vld [vmem:[%s1 + $0x160] sm:$0xff]
  %v516 = vld [vmem:[%s1 + $0x168] sm:$0xff]
  %v517 = vld [vmem:[%s1 + $0x170] sm:$0xff]
  %v518 = vld [vmem:[%s1 + $0x178] sm:$0xff]
  %v519 = vld [vmem:[%s1 + $0x180] sm:$0xff]
  %v520 = vld [vmem:[%s1 + $0x188] sm:$0xff]
  %v521 = vld [vmem:[%s1 + $0x190] sm:$0xff]
  %v522 = vld [vmem:[%s1 + $0x198] sm:$0xff]
  %v523 = vld [vmem:[%s1 + $0x1a0] sm:$0xff]
  %v524 = vld [vmem:[%s1 + $0x1a8] sm:$0xff]
  %v525 = vld [vmem:[%s1 + $0x1b0] sm:$0xff]
  %v526 = vld [vmem:[%s1 + $0x1b8] sm:$0xff]
  %v527 = vld [vmem:[%s1 + $0x1c0] sm:$0xff]
  %v528 = vld [vmem:[%s1 + $0x1c8] sm:$0xff]
  %v529 = vld [vmem:[%s1 + $0x1d0] sm:$0xff]
  %v530 = vld [vmem:[%s1 + $0x1d8] sm:$0xff]
  %v531 = vld [vmem:[%s1 + $0x1e0] sm:$0xff]
  %v532 = vld [vmem:[%s1 + $0x1e8] sm:$0xff]
  %v533 = vld [vmem:[%s1 + $0x1f0] sm:$0xff]
  %v534 = vld [vmem:[%s1 + $0x1f8] sm:$0xff]
  %v535 = vld [vmem:[%s1 + $0x200] sm:$0xff]
  %v536 = vld [vmem:[%s1 + $0x208] sm:$0xff]
  %v537 = vld [vmem:[%s1 + $0x210] sm:$0xff]
  %v538 = vld [vmem:[%s1 + $0x218] sm:$0xff]
  %v539 = vld [vmem:[%s1 + $0x220] sm:$0xff]
  %v540 = vld [vmem:[%s1 + $0x228] sm:$0xff]
  %v541 = vld [vmem:[%s1 + $0x230] sm:$0xff]
  %v542 = vld [vmem:[%s1 + $0x238] sm:$0xff]
  %v543 = vld [vmem:[#allocation3] sm:$0xff]
  %v544 = vld [vmem:[#allocation3 + $0x8] sm:$0xff]
  %v545 = vld [vmem:[#allocation3 + $0x10] sm:$0xff]
  %v546 = vld [vmem:[#allocation3 + $0x18] sm:$0xff]
  %v547 = vld [vmem:[#allocation3 + $0x20] sm:$0xff]
  %v548 = vld [vmem:[#allocation3 + $0x28] sm:$0xff]
  %v549 = vld [vmem:[#allocation3 + $0x30] sm:$0xff]
  %v550 = vld [vmem:[#allocation3 + $0x38] sm:$0xff]
  %v551 = vld [vmem:[#allocation3 + $0x40] sm:$0xff]
  %v552 = vld [vmem:[#allocation3 + $0x48] sm:$0xff]
  %v553 = vld [vmem:[#allocation3 + $0x50] sm:$0xff]
  %v554 = vld [vmem:[#allocation3 + $0x58] sm:$0xff]
  %v555 = vld [vmem:[%s2 + $0x1] sm:$0x1]
  %v556 = vperm.slane %v555, 0
  %557 = vmatpush.msra.mxu0 %v510
  %558 = vmatpush.msra.mxu0 %v509
  %559 = vmatpush.msra.mxu0 %v508
  %560 = vmatpush.msra.mxu0 %v507
  %561 = vmatpush.msra.mxu0 %v506
  %562 = vmatpush.msra.mxu0 %v505
  %563 = vmatpush.msra.mxu0 %v504
  %564 = vmatpush.msra.mxu0 %v503
  %565 = vmatpush.msra.mxu0 %v502
  %566 = vmatpush.msra.mxu0 %v501
  %567 = vmatpush.msra.mxu0 %v500
  %568 = vmatpush.msra.mxu0 %v499
  %569 = vmatpush.msra.mxu0 %v498
  %570 = vmatpush.msra.mxu0 %v497
  %571 = vmatpush.msra.mxu0 %v496
  %572 = vmatpush.msra.mxu0 %v495
  %573 = vmatmul.f32.gmra.mxu0 %v543
  %v574 = vpop.f32.mrf.mxu0
  %v575 = vadd.f32 %v556, %v574
  %576 = vmatmul.f32.gmra.mxu0 %v546
  %v577 = vpop.f32.mrf.mxu0
  %v578 = vadd.f32 %v556, %v577
  %579 = vmatmul.f32.gmra.mxu0 %v549
  %v580 = vpop.f32.mrf.mxu0
  %v581 = vadd.f32 %v556, %v580
  %582 = vmatmul.f32.gmra.mxu0 %v552
  %v583 = vpop.f32.mrf.mxu0
  %v584 = vadd.f32 %v556, %v583
  %585 = vdwg.mxu0
  %586 = vmatpush.msra.mxu0 %v526
  %587 = vmatpush.msra.mxu0 %v525
  %588 = vmatpush.msra.mxu0 %v524
  %589 = vmatpush.msra.mxu0 %v523
  %590 = vmatpush.msra.mxu0 %v522
  %591 = vmatpush.msra.mxu0 %v521
  %592 = vmatpush.msra.mxu0 %v520
  %593 = vmatpush.msra.mxu0 %v519
  %594 = vmatpush.msra.mxu0 %v518
  %595 = vmatpush.msra.mxu0 %v517
  %596 = vmatpush.msra.mxu0 %v516
  %597 = vmatpush.msra.mxu0 %v515
  %598 = vmatpush.msra.mxu0 %v514
  %599 = vmatpush.msra.mxu0 %v513
  %600 = vmatpush.msra.mxu0 %v512
  %601 = vmatpush.msra.mxu0 %v511
  %602 = vmatmul.f32.gmra.mxu0 %v544
  %v603 = vpop.f32.mrf.mxu0
  %v604 = vadd.f32 %v575, %v603
  %605 = vmatmul.f32.gmra.mxu0 %v547
  %v606 = vpop.f32.mrf.mxu0
  %v607 = vadd.f32 %v578, %v606
  %608 = vmatmul.f32.gmra.mxu0 %v550
  %v609 = vpop.f32.mrf.mxu0
  %v610 = vadd.f32 %v581, %v609
  %611 = vmatmul.f32.gmra.mxu0 %v553
  %v612 = vpop.f32.mrf.mxu0
  %v613 = vadd.f32 %v584, %v612
  %614 = vdwg.mxu0
  %615 = vmatpush.msra.mxu0 %v542
  %616 = vmatpush.msra.mxu0 %v541
  %617 = vmatpush.msra.mxu0 %v540
  %618 = vmatpush.msra.mxu0 %v539
  %619 = vmatpush.msra.mxu0 %v538
  %620 = vmatpush.msra.mxu0 %v537
  %621 = vmatpush.msra.mxu0 %v536
  %622 = vmatpush.msra.mxu0 %v535
  %623 = vmatpush.msra.mxu0 %v534
  %624 = vmatpush.msra.mxu0 %v533
  %625 = vmatpush.msra.mxu0 %v532
  %626 = vmatpush.msra.mxu0 %v531
  %627 = vmatpush.msra.mxu0 %v530
  %628 = vmatpush.msra.mxu0 %v529
  %629 = vmatpush.msra.mxu0 %v528
  %630 = vmatpush.msra.mxu0 %v527
  %631 = vmatmul.f32.gmra.mxu0 %v545
  %v632 = vpop.f32.mrf.mxu0
  %v633 = vadd.f32 %v604, %v632
  %634 = vmatmul.f32.gmra.mxu0 %v548
  %v635 = vpop.f32.mrf.mxu0
  %v636 = vadd.f32 %v607, %v635
  %637 = vmatmul.f32.gmra.mxu0 %v551
  %v638 = vpop.f32.mrf.mxu0
  %v639 = vadd.f32 %v610, %v638
  %640 = vmatmul.f32.gmra.mxu0 %v554
  %v641 = vpop.f32.mrf.mxu0
  %v642 = vadd.f32 %v613, %v641
  %643 = vdwg.mxu0
  %vm644 = vcmp.ge.f32.partialorder %v633, 0.0
  %vm645 = vcmp.ge.f32.partialorder %v636, 0.0
  %vm646 = vcmp.ge.f32.partialorder %v639, 0.0
  %vm647 = vcmp.ge.f32.partialorder %v642, 0.0
  %v648 = vmul.f32 %v633, 0.01
  %v649 = vmul.f32 %v636, 0.01
  %v650 = vmul.f32 %v639, 0.01
  %v651 = vmul.f32 %v642, 0.01
  %v652 = vsel %vm644, %v633, %v648
  %v653 = vsel %vm645, %v636, %v649
  %v654 = vsel %vm646, %v639, %v650
  %v655 = vsel %vm647, %v642, %v651
  %656 = vst.msk [vmem:[#allocation4] sm:$0xff] %vm426, 0.0
  %658 = vrot.lane.b32.xlu0 %v652, 96
  %v659 = vpop.permute.xlu0 %658
  %661 = vst.msk [vmem:[#allocation4] sm:$0xff] %vm28, %v659
  %662 = vst.msk [vmem:[#allocation4 + $0x8] sm:$0xff] %vm295, %v659
  %664 = vrot.lane.b32.xlu0 %v653, 64
  %v665 = vpop.permute.xlu0 %664
  %667 = vst.msk [vmem:[#allocation4 + $0x8] sm:$0xff] %vm438, %v665
  %668 = vst.msk [vmem:[#allocation4 + $0x10] sm:$0xff] %vm440, %v665
  %670 = vrot.lane.b32.xlu0 %v654, 32
  %v671 = vpop.permute.xlu0 %670
  %673 = vst.msk [vmem:[#allocation4 + $0x10] sm:$0xff] %vm446, %v671
  %674 = vst.msk [vmem:[#allocation4 + $0x18] sm:$0xff] %vm426, %v653
  %675 = vrot.lane.b32.xlu0 %v654, 96
  %v676 = vpop.permute.xlu0 %675
  %678 = vst.msk [vmem:[#allocation4 + $0x18] sm:$0xff] %vm28, %v676
  %679 = vst.msk [vmem:[#allocation4 + $0x20] sm:$0xff] %vm295, %v676
  %681 = vrot.lane.b32.xlu0 %v655, 64
  %v682 = vpop.permute.xlu0 %681
  %684 = vst.msk [vmem:[#allocation4 + $0x20] sm:$0xff] %vm438, %v682
  %685 = vst.msk [vmem:[#allocation4 + $0x28] sm:$0xff] %vm440, %v682
  %686 = vst.msk [vmem:[#allocation4 + $0x28] sm:$0xff] %vm446, 0.0
  %v687 = vld [vmem:[%s1 + $0x240] sm:$0xff]
  %v688 = vld [vmem:[%s1 + $0x248] sm:$0xff]
  %v689 = vld [vmem:[%s1 + $0x250] sm:$0xff]
  %v690 = vld [vmem:[%s1 + $0x258] sm:$0xff]
  %v691 = vld [vmem:[%s1 + $0x260] sm:$0xff]
  %v692 = vld [vmem:[%s1 + $0x268] sm:$0xff]
  %v693 = vld [vmem:[%s1 + $0x270] sm:$0xff]
  %v694 = vld [vmem:[%s1 + $0x278] sm:$0xff]
  %v695 = vld [vmem:[%s1 + $0x280] sm:$0xff]
  %v696 = vld [vmem:[%s1 + $0x288] sm:$0xff]
  %v697 = vld [vmem:[%s1 + $0x290] sm:$0xff]
  %v698 = vld [vmem:[%s1 + $0x298] sm:$0xff]
  %v699 = vld [vmem:[%s1 + $0x2a0] sm:$0xff]
  %v700 = vld [vmem:[%s1 + $0x2a8] sm:$0xff]
  %v701 = vld [vmem:[%s1 + $0x2b0] sm:$0xff]
  %v702 = vld [vmem:[%s1 + $0x2b8] sm:$0xff]
  %v703 = vld [vmem:[%s1 + $0x2c0] sm:$0xff]
  %v704 = vld [vmem:[%s1 + $0x2c8] sm:$0xff]
  %v705 = vld [vmem:[%s1 + $0x2d0] sm:$0xff]
  %v706 = vld [vmem:[%s1 + $0x2d8] sm:$0xff]
  %v707 = vld [vmem:[%s1 + $0x2e0] sm:$0xff]
  %v708 = vld [vmem:[%s1 + $0x2e8] sm:$0xff]
  %v709 = vld [vmem:[%s1 + $0x2f0] sm:$0xff]
  %v710 = vld [vmem:[%s1 + $0x2f8] sm:$0xff]
  %v711 = vld [vmem:[%s1 + $0x300] sm:$0xff]
  %v712 = vld [vmem:[%s1 + $0x308] sm:$0xff]
  %v713 = vld [vmem:[%s1 + $0x310] sm:$0xff]
  %v714 = vld [vmem:[%s1 + $0x318] sm:$0xff]
  %v715 = vld [vmem:[%s1 + $0x320] sm:$0xff]
  %v716 = vld [vmem:[%s1 + $0x328] sm:$0xff]
  %v717 = vld [vmem:[%s1 + $0x330] sm:$0xff]
  %v718 = vld [vmem:[%s1 + $0x338] sm:$0xff]
  %v719 = vld [vmem:[%s1 + $0x340] sm:$0xff]
  %v720 = vld [vmem:[%s1 + $0x348] sm:$0xff]
  %v721 = vld [vmem:[%s1 + $0x350] sm:$0xff]
  %v722 = vld [vmem:[%s1 + $0x358] sm:$0xff]
  %v723 = vld [vmem:[%s1 + $0x360] sm:$0xff]
  %v724 = vld [vmem:[%s1 + $0x368] sm:$0xff]
  %v725 = vld [vmem:[%s1 + $0x370] sm:$0xff]
  %v726 = vld [vmem:[%s1 + $0x378] sm:$0xff]
  %v727 = vld [vmem:[%s1 + $0x380] sm:$0xff]
  %v728 = vld [vmem:[%s1 + $0x388] sm:$0xff]
  %v729 = vld [vmem:[%s1 + $0x390] sm:$0xff]
  %v730 = vld [vmem:[%s1 + $0x398] sm:$0xff]
  %v731 = vld [vmem:[%s1 + $0x3a0] sm:$0xff]
  %v732 = vld [vmem:[%s1 + $0x3a8] sm:$0xff]
  %v733 = vld [vmem:[%s1 + $0x3b0] sm:$0xff]
  %v734 = vld [vmem:[%s1 + $0x3b8] sm:$0xff]
  %v735 = vld [vmem:[#allocation4] sm:$0xff]
  %v736 = vld [vmem:[#allocation4 + $0x8] sm:$0xff]
  %v737 = vld [vmem:[#allocation4 + $0x10] sm:$0xff]
  %v738 = vld [vmem:[#allocation4 + $0x18] sm:$0xff]
  %v739 = vld [vmem:[#allocation4 + $0x20] sm:$0xff]
  %v740 = vld [vmem:[#allocation4 + $0x28] sm:$0xff]
  %v741 = vld [vmem:[%s2 + $0x2] sm:$0x1]
  %v742 = vperm.slane %v741, 0
  %743 = vmatpush.msra.mxu0 %v702
  %744 = vmatpush.msra.mxu0 %v701
  %745 = vmatpush.msra.mxu0 %v700
  %746 = vmatpush.msra.mxu0 %v699
  %747 = vmatpush.msra.mxu0 %v698
  %748 = vmatpush.msra.mxu0 %v697
  %749 = vmatpush.msra.mxu0 %v696
  %750 = vmatpush.msra.mxu0 %v695
  %751 = vmatpush.msra.mxu0 %v694
  %752 = vmatpush.msra.mxu0 %v693
  %753 = vmatpush.msra.mxu0 %v692
  %754 = vmatpush.msra.mxu0 %v691
  %755 = vmatpush.msra.mxu0 %v690
  %756 = vmatpush.msra.mxu0 %v689
  %757 = vmatpush.msra.mxu0 %v688
  %758 = vmatpush.msra.mxu0 %v687
  %759 = vmatmul.f32.gmra.mxu0 %v735
  %v760 = vpop.f32.mrf.mxu0
  %v761 = vadd.f32 %v742, %v760
  %762 = vmatmul.f32.gmra.mxu0 %v738
  %v763 = vpop.f32.mrf.mxu0
  %v764 = vadd.f32 %v742, %v763
  %765 = vdwg.mxu0
  %766 = vmatpush.msra.mxu0 %v718
  %767 = vmatpush.msra.mxu0 %v717
  %768 = vmatpush.msra.mxu0 %v716
  %769 = vmatpush.msra.mxu0 %v715
  %770 = vmatpush.msra.mxu0 %v714
  %771 = vmatpush.msra.mxu0 %v713
  %772 = vmatpush.msra.mxu0 %v712
  %773 = vmatpush.msra.mxu0 %v711
  %774 = vmatpush.msra.mxu0 %v710
  %775 = vmatpush.msra.mxu0 %v709
  %776 = vmatpush.msra.mxu0 %v708
  %777 = vmatpush.msra.mxu0 %v707
  %778 = vmatpush.msra.mxu0 %v706
  %779 = vmatpush.msra.mxu0 %v705
  %780 = vmatpush.msra.mxu0 %v704
  %781 = vmatpush.msra.mxu0 %v703
  %782 = vmatmul.f32.gmra.mxu0 %v736
  %v783 = vpop.f32.mrf.mxu0
  %v784 = vadd.f32 %v761, %v783
  %785 = vmatmul.f32.gmra.mxu0 %v739
  %v786 = vpop.f32.mrf.mxu0
  %v787 = vadd.f32 %v764, %v786
  %788 = vdwg.mxu0
  %789 = vmatpush.msra.mxu0 %v734
  %790 = vmatpush.msra.mxu0 %v733
  %791 = vmatpush.msra.mxu0 %v732
  %792 = vmatpush.msra.mxu0 %v731
  %793 = vmatpush.msra.mxu0 %v730
  %794 = vmatpush.msra.mxu0 %v729
  %795 = vmatpush.msra.mxu0 %v728
  %796 = vmatpush.msra.mxu0 %v727
  %797 = vmatpush.msra.mxu0 %v726
  %798 = vmatpush.msra.mxu0 %v725
  %799 = vmatpush.msra.mxu0 %v724
  %800 = vmatpush.msra.mxu0 %v723
  %801 = vmatpush.msra.mxu0 %v722
  %802 = vmatpush.msra.mxu0 %v721
  %803 = vmatpush.msra.mxu0 %v720
  %804 = vmatpush.msra.mxu0 %v719
  %805 = vmatmul.f32.gmra.mxu0 %v737
  %v806 = vpop.f32.mrf.mxu0
  %v807 = vadd.f32 %v784, %v806
  %808 = vmatmul.f32.gmra.mxu0 %v740
  %v809 = vpop.f32.mrf.mxu0
  %v810 = vadd.f32 %v787, %v809
  %811 = vdwg.mxu0
  %vm812 = vcmp.ge.f32.partialorder %v807, 0.0
  %vm813 = vcmp.ge.f32.partialorder %v810, 0.0
  %v814 = vmul.f32 %v807, 0.01
  %v815 = vmul.f32 %v810, 0.01
  %v816 = vsel %vm812, %v807, %v814
  %v817 = vsel %vm813, %v810, %v815
  %v818 = vld [vmem:[%s2 + $0x3] sm:$0x1]
  %v819 = vld [vmem:[%s1 + $0x3c0] sm:$0xff]
  %v820 = vld [vmem:[%s1 + $0x3c8] sm:$0xff]
  %v821 = vld [vmem:[%s1 + $0x3d0] sm:$0xff]
  %v822 = vld [vmem:[%s1 + $0x3d8] sm:$0xff]
  %v823 = vld [vmem:[%s1 + $0x3e0] sm:$0xff]
  %v824 = vld [vmem:[%s1 + $0x3e8] sm:$0xff]
  %v825 = vld [vmem:[%s1 + $0x3f0] sm:$0xff]
  %v826 = vld [vmem:[%s1 + $0x3f8] sm:$0xff]
  %v827 = vld [vmem:[%s1 + $0x400] sm:$0xff]
  %v828 = vld [vmem:[%s1 + $0x408] sm:$0xff]
  %v829 = vld [vmem:[%s1 + $0x410] sm:$0xff]
  %v830 = vld [vmem:[%s1 + $0x418] sm:$0xff]
  %v832 = vsel %vm426, %v816, 0
  %834 = vmatpush.msra.mxu0 0.0
  %835 = vmatpush.msra.mxu0 0.0
  %836 = vmatpush.msra.mxu0 0.0
  %837 = vmatpush.msra.mxu0 0.0
  %838 = vmatpush.msra.mxu0 %v830
  %839 = vmatpush.msra.mxu0 %v829
  %840 = vmatpush.msra.mxu0 %v828
  %841 = vmatpush.msra.mxu0 %v827
  %842 = vmatpush.msra.mxu0 %v826
  %843 = vmatpush.msra.mxu0 %v825
  %844 = vmatpush.msra.mxu0 %v824
  %845 = vmatpush.msra.mxu0 %v823
  %846 = vmatpush.msra.mxu0 %v822
  %847 = vmatpush.msra.mxu0 %v821
  %848 = vmatpush.msra.mxu0 %v820
  %849 = vmatpush.msra.mxu0 %v819
  %850 = vmatmul.f32.gmra.mxu0 %v832
  %v851 = vpop.f32.mrf.mxu0
  %v852 = vadd.f32 0.0, %v851
  %853 = vdwg.mxu0
  %v854 = vperm.slane %v818, 0
  %v855 = vadd.f32 %v854, %v852
  %v856 = vld [vmem:[%s1 + $0x420] sm:$0xff]
  %v857 = vld [vmem:[%s1 + $0x428] sm:$0xff]
  %v858 = vld [vmem:[%s1 + $0x430] sm:$0xff]
  %v859 = vld [vmem:[%s1 + $0x438] sm:$0xff]
  %v860 = vld [vmem:[%s1 + $0x440] sm:$0xff]
  %v861 = vld [vmem:[%s1 + $0x448] sm:$0xff]
  %v862 = vld [vmem:[%s1 + $0x450] sm:$0xff]
  %v863 = vld [vmem:[%s1 + $0x458] sm:$0xff]
  %v864 = vld [vmem:[%s1 + $0x460] sm:$0xff]
  %v865 = vld [vmem:[%s1 + $0x468] sm:$0xff]
  %v866 = vld [vmem:[%s1 + $0x470] sm:$0xff]
  %v867 = vld [vmem:[%s1 + $0x478] sm:$0xff]
  %v869 = vsel %vm426, %v817, 0
  %871 = vmatpush.msra.mxu0 0.0
  %872 = vmatpush.msra.mxu0 0.0
  %873 = vmatpush.msra.mxu0 0.0
  %874 = vmatpush.msra.mxu0 0.0
  %875 = vmatpush.msra.mxu0 %v867
  %876 = vmatpush.msra.mxu0 %v866
  %877 = vmatpush.msra.mxu0 %v865
  %878 = vmatpush.msra.mxu0 %v864
  %879 = vmatpush.msra.mxu0 %v863
  %880 = vmatpush.msra.mxu0 %v862
  %881 = vmatpush.msra.mxu0 %v861
  %882 = vmatpush.msra.mxu0 %v860
  %883 = vmatpush.msra.mxu0 %v859
  %884 = vmatpush.msra.mxu0 %v858
  %885 = vmatpush.msra.mxu0 %v857
  %886 = vmatpush.msra.mxu0 %v856
  %887 = vmatmul.f32.gmra.mxu0 %v869
  %v888 = vpop.f32.mrf.mxu0
  %v889 = vadd.f32 0.0, %v888
  %890 = vdwg.mxu0
  %v891 = vadd.f32 %v855, %v889
  %892 = vst.msk [vmem:[%s3] sm:$0xff] %vm440, %v891
  // Predicated region
  $region14: #{_lambda_.1} parent=0 // pred_check
    _
  $region15: #{_lambda_.1} parent=0 // pred_check_branch
    %894 = sbr.rel (0) target = $region17
  $region16: #{_lambda_.1} parent=0 // pred_region
    _
  $region17: #{_lambda_.1} parent=0 // pred_fallthru
    _
  // Predicated region
  $region18: #{_lambda_.1} parent=0 // pred_check
    _
  $region19: #{_lambda_.1} parent=0 // pred_check_branch
    %896 = sbr.rel (0) target = $region21
  $region20: #{_lambda_.1} parent=0 // pred_region
    _
  $region21: #{_lambda_.1} parent=0 // pred_fallthru
    _

</llo_original>
